<compile_context>
chip_gen: v5e
topology: v5e:2x2
jax: 0.10.0
libtpu: 0.0.40
codegen_flags: <defaults>
</compile_context>

<pallas_src>
import functools

import jax
import jax.numpy as jnp
from jax.experimental import pallas as pl
from jax.experimental.pallas import tpu as pltpu

LANE = 128  # all activation / weight column widths are padded to one full vreg lane width


def conv2d_size_out(size, kernel_size, stride):
    return (size - (kernel_size - 1) - 1) // stride + 1


# ----------------------------------------------------------------------------
# Fused forward kernel.  All refs are VMEM-resident.  Activations use the
# blocked 2-D layout: rows = (h, batch), cols = (w, channel) padded to 128
# lanes.  a1/a2/a3 are f32 VMEM scratch for the conv activations.
# ----------------------------------------------------------------------------
def _fused_dqn_kernel(x_ref, wc_ref, wd_ref, b_ref, o_ref,
                      a1_ref, a2_ref, a3_ref,
                      *, nb, conv1_starts, k1, k2, k3, oh3):
    f32 = jnp.float32
    bf16 = jnp.bfloat16

    def bias(i):                               # static 128-lane slice of the bias blob
        return b_ref[:, i * LANE:(i + 1) * LANE]

    def conv_relu(src_ref, dst_ref, starts, band0, bias_idx):
        rows = dst_ref.shape[0]                # oh_l * nb
        # Accumulator initialized from (first banded dot + bias): no zeros
        # materialization and the bias add rides the first accumulate.
        acc = jnp.dot(src_ref[starts[0]:starts[0] + rows, :].astype(bf16),
                      wc_ref[band0], preferred_element_type=f32) + bias(bias_idx)
        for i in range(1, len(starts)):
            s = starts[i]                      # static, multiple of nb (nb % 8 == 0)
            acc = acc + jnp.dot(src_ref[s:s + rows, :].astype(bf16),
                                wc_ref[band0 + i], preferred_element_type=f32)
        dst_ref[...] = jnp.maximum(acc, 0.0)   # f32 epilogue

    # conv1 + ReLU: stride-2 in H handled by the even/odd-grouped input rows
    # (conv1_starts), stride-2 in W baked into the banded weights.
    conv_relu(x_ref, a1_ref, conv1_starts, 0, 0)
    # conv2 + ReLU (stride 1): one banded matmul per kernel-row offset.
    conv_relu(a1_ref, a2_ref, tuple(i * nb for i in range(k2)), k1, 1)
    # conv3 + ReLU.
    conv_relu(a2_ref, a3_ref, tuple(i * nb for i in range(k3)), k1 + k2, 2)

    # dense1 + ReLU: torch's x.view(N,-1) @ W.T as a sum over the oh3 row
    # blocks of (nb, 128) x (128, dense) matmuls; bias folded into block 0.
    accd = jnp.dot(a3_ref[0:nb, :].astype(bf16), wd_ref[0:LANE, :],
                   preferred_element_type=f32) + bias(3)
    for h in range(1, oh3):
        accd = accd + jnp.dot(a3_ref[h * nb:(h + 1) * nb, :].astype(bf16),
                              wd_ref[h * LANE:(h + 1) * LANE, :],
                              preferred_element_type=f32)
    y1 = jnp.maximum(accd, 0.0).astype(bf16)

    # dense2 (no activation) -> lane-dense (nb, 128) store (the only HBM store).
    o_ref[...] = (jnp.dot(y1, wd_ref[oh3 * LANE:(oh3 + 1) * LANE, :],
                          preferred_element_type=f32) + bias(4)).astype(o_ref.dtype)


# ----------------------------------------------------------------------------
# Model-boundary glue (per forward): blocked input, rows = (h, batch) with
# even-h row blocks first then odd-h (for the in-kernel stride-2 band slices),
# cols = (w, cin) zero-padded to 128 lanes.
# ----------------------------------------------------------------------------
def _to_blocked_input(x_nchw, nb, even_odd):
    n, c0, h0, w0 = x_nchw.shape
    x = jnp.pad(x_nchw, ((0, nb - n), (0, 0), (0, 0), (0, 0)))
    x = jnp.transpose(x, (2, 0, 3, 1))                     # (h0, nb, w0, c0)
    if even_odd:
        x = jnp.concatenate([x[0::2], x[1::2]], axis=0)    # even-h blocks, then odd-h
    x = x.reshape(h0 * nb, w0 * c0)
    return jnp.pad(x, ((0, 0), (0, LANE - w0 * c0)))       # pad cols to 128 lanes


# ----------------------------------------------------------------------------
# One-time weight packing (all reshape/transpose hoisted to init; bf16 weights).
# ----------------------------------------------------------------------------
def _banded_conv_weight(w_oihw, row_off, w_in, w_out, stride):
    """Banded block-Toeplitz matrix of shape (w_in*Cin, w_out*Cout):
    activation-rows-slice @ M == this kernel-row-offset's contribution to the
    conv output in the (w, c) column layout (W-stride baked in)."""
    cout, cin, k, _ = w_oihw.shape
    win_idx = jnp.arange(w_in)[:, None, None]
    wout_idx = jnp.arange(w_out)[None, :, None]
    j_idx = jnp.arange(k)[None, None, :]
    ind = (win_idx == stride * wout_idx + j_idx).astype(w_oihw.dtype)  # (w_in, w_out, K)
    wsl = w_oihw[:, :, row_off, :]                                     # (Cout, Cin, K)
    m = jnp.einsum('xwj,ocj->xcwo', ind, wsl)                          # (w_in, Cin, w_out, Cout)
    return m.reshape(w_in * cin, w_out * cout)


def _pad2(m):
    return jnp.pad(m, ((0, LANE - m.shape[0]), (0, LANE - m.shape[1])))


def pack_params(params, config, outputs):
    ch = config['model']['channels']
    ks = config['model']['kernels']
    st = config['model']['strides']
    c0 = config['atari']['frames_stacked']
    h0 = config['atari']['scaled_image_height']
    w0 = config['atari']['scaled_image_width']
    dense = config['model']['dense_size']
    assert config['model']['num_layers'] == 3
    assert st[0] in (1, 2) and st[1] == 1 and st[2] == 1, \
        "banded packing assumes stride-{1,2} conv1 and stride-1 conv2/conv3"
    assert w0 * c0 <= LANE and ch[0] * conv2d_size_out(w0, ks[0], st[0]) <= LANE

    ow1 = conv2d_size_out(w0, ks[0], st[0])
    ow2 = conv2d_size_out(ow1, ks[1], st[1])
    ow3 = conv2d_size_out(ow2, ks[2], st[2])
    oh1 = conv2d_size_out(h0, ks[0], st[0])
    oh2 = conv2d_size_out(oh1, ks[1], st[1])
    oh3 = conv2d_size_out(oh2, ks[2], st[2])

    # One conv-weight blob: k1+k2+k3 banded (128,128) matrices.
    bands = []
    for i in range(ks[0]):
        bands.append(_pad2(_banded_conv_weight(params['conv1_w'], i, w0, ow1, st[0])))
    for i in range(ks[1]):
        bands.append(_pad2(_banded_conv_weight(params['conv2_w'], i, ow1, ow2, st[1])))
    for i in range(ks[2]):
        bands.append(_pad2(_banded_conv_weight(params['conv3_w'], i, ow2, ow3, st[2])))
    wconv = jnp.stack(bands).astype(jnp.bfloat16)          # (k1+k2+k3, 128, 128)

    # dense1 rows reordered from torch's (c,h,w) flatten to (h,w,c), each
    # h-block padded to 128 rows; dense2 transposed; both padded to 128 cols
    # and concatenated into one blob.
    wd1 = params['dense1_w'].reshape(dense, ch[2], oh3, ow3)
    wd1 = jnp.transpose(wd1, (2, 3, 1, 0)).reshape(oh3, ow3 * ch[2], dense)
    wd1 = jnp.pad(wd1, ((0, 0), (0, LANE - ow3 * ch[2]), (0, LANE - dense)))
    wd1 = wd1.reshape(oh3 * LANE, LANE)
    wd2 = jnp.pad(params['dense2_w'].T, ((0, LANE - dense), (0, LANE - outputs)))
    wdense = jnp.concatenate([wd1, wd2], axis=0).astype(jnp.bfloat16)  # ((oh3+1)*128, 128)

    # One bias blob (f32 epilogue), each layer's bias tiled to its (w, c)
    # column layout and padded to 128 lanes.
    def padb(b):
        return jnp.pad(b, (0, LANE - b.shape[0]))
    biases = jnp.concatenate([
        padb(jnp.tile(params['conv1_b'], ow1)),
        padb(jnp.tile(params['conv2_b'], ow2)),
        padb(jnp.tile(params['conv3_b'], ow3)),
        padb(params['dense1_b']),
        padb(params['dense2_b']),
    ]).reshape(1, 5 * LANE).astype(jnp.float32)

    return {'wconv': wconv, 'wdense': wdense, 'biases': biases}


# ----------------------------------------------------------------------------
# Forward pass: one boundary transpose/pad + a single fused pallas_call.
# ----------------------------------------------------------------------------
def dqn_forward(packed, x_nchw, *, config, outputs):
    ks = config['model']['kernels']
    st = config['model']['strides']
    h0 = config['atari']['scaled_image_height']
    n = x_nchw.shape[0]
    nb = max(8, ((n + 7) // 8) * 8)            # 8-aligned batch tile (sublane-aligned slices)

    oh1 = conv2d_size_out(h0, ks[0], st[0])
    oh2 = conv2d_size_out(oh1, ks[1], st[1])
    oh3 = conv2d_size_out(oh2, ks[2], st[2])

    if st[0] == 2:
        h_even = (h0 + 1) // 2                 # number of even-h row blocks in the input
        conv1_starts = tuple(((kh % 2) * h_even + kh // 2) * nb for kh in range(ks[0]))
        xb = _to_blocked_input(x_nchw, nb, even_odd=True)
    else:
        conv1_starts = tuple(kh * nb for kh in range(ks[0]))
        xb = _to_blocked_input(x_nchw, nb, even_odd=False)

    kernel = functools.partial(
        _fused_dqn_kernel, nb=nb, conv1_starts=conv1_starts,
        k1=ks[0], k2=ks[1], k3=ks[2], oh3=oh3)

    vmem = pl.BlockSpec(memory_space=pltpu.MemorySpace.VMEM)
    out = pl.pallas_call(
        kernel,
        out_shape=jax.ShapeDtypeStruct((nb, LANE), jnp.float32),
        in_specs=[vmem] * 4,
        out_specs=vmem,
        scratch_shapes=[
            pltpu.VMEM((oh1 * nb, LANE), jnp.float32),     # conv1 activation
            pltpu.VMEM((oh2 * nb, LANE), jnp.float32),     # conv2 activation
            pltpu.VMEM((oh3 * nb, LANE), jnp.float32),     # conv3 activation
        ],
    )(xb, packed['wconv'], packed['wdense'], packed['biases'])
    return out[:n, :outputs]                   # drop batch / lane padding


# ----------------------------------------------------------------------------
# Parameter init (torch-layout params, used for packing and the reference).
# ----------------------------------------------------------------------------
def init_dqn_params(key, config, outputs):
    h = config['atari']['scaled_image_height']
    w = config['atari']['scaled_image_width']
    channels = config['model']['channels']
    kernels = config['model']['kernels']
    strides = config['model']['strides']
    num_layers = config['model']['num_layers']
    dense_size = config['model']['dense_size']
    in_ch = config['atari']['frames_stacked']

    params = {}
    keys = jax.random.split(key, 10)
    cin = in_ch
    for i in range(num_layers):
        cout, k = channels[i], kernels[i]
        fan_in = cin * k * k
        bound = 1.0 / jnp.sqrt(fan_in)
        params[f'conv{i+1}_w'] = jax.random.uniform(
            keys[2 * i], (cout, cin, k, k), jnp.float32, -bound, bound)
        params[f'conv{i+1}_b'] = jax.random.uniform(
            keys[2 * i + 1], (cout,), jnp.float32, -bound, bound)
        cin = cout
        h = conv2d_size_out(h, k, strides[i])
        w = conv2d_size_out(w, k, strides[i])

    linear_input_size = h * w * channels[num_layers - 1]
    b1 = 1.0 / jnp.sqrt(linear_input_size)
    params['dense1_w'] = jax.random.uniform(
        keys[6], (dense_size, linear_input_size), jnp.float32, -b1, b1)
    params['dense1_b'] = jax.random.uniform(
        keys[7], (dense_size,), jnp.float32, -b1, b1)
    b2 = 1.0 / jnp.sqrt(dense_size)
    params['dense2_w'] = jax.random.uniform(
        keys[8], (outputs, dense_size), jnp.float32, -b2, b2)
    params['dense2_b'] = jax.random.uniform(
        keys[9], (outputs,), jnp.float32, -b2, b2)
    return params, linear_input_size


# Pure-JAX reference (for correctness check only).
def dqn_forward_ref(params, x_nchw, config):
    num_layers = config['model']['num_layers']
    strides = config['model']['strides']
    x = x_nchw
    for i in range(num_layers):
        w = params[f'conv{i+1}_w']
        b = params[f'conv{i+1}_b']
        s = strides[i]
        x = jax.lax.conv_general_dilated(
            x, w, window_strides=(s, s), padding='VALID',
            dimension_numbers=('NCHW', 'OIHW', 'NCHW'))
        x = jax.nn.relu(x + b[None, :, None, None])
    n = x.shape[0]
    x = x.reshape(n, -1)
    x = jax.nn.relu(x @ params['dense1_w'].T + params['dense1_b'])
    x = x @ params['dense2_w'].T + params['dense2_b']
    return x


if __name__ == "__main__":
    config = {
        'atari': {'scaled_image_height': 20, 'scaled_image_width': 20,
                  'frames_stacked': 4},
        'model': {'num_layers': 3, 'channels': [8, 16, 16],
                  'kernels': [3, 3, 3], 'strides': [2, 1, 1],
                  'dense_size': 64},
        'rl_params': {'use_noisy_nets': False, 'sigma_init': 0.4},
    }
    # TODO(synk): NoisyLinear path (use_noisy_nets=True) not exercised; the
    # effective weight w_mu + w_sigma*w_eps would be formed host-side and
    # packed/fed to the same fused kernel.
    outputs = 6
    batch = 2   # padded to an 8-aligned batch tile inside dqn_forward

    key = jax.random.PRNGKey(0)
    pkey, xkey = jax.random.split(key)
    params, lin_in = init_dqn_params(pkey, config, outputs)
    packed = pack_params(params, config, outputs)

    x = jax.random.uniform(
        xkey,
        (batch, config['atari']['frames_stacked'],
         config['atari']['scaled_image_height'],
         config['atari']['scaled_image_width']),
        jnp.float32)

    fwd = jax.jit(functools.partial(dqn_forward, config=config, outputs=outputs))
    out = jax.block_until_ready(fwd(packed, x))

    ref = jax.block_until_ready(dqn_forward_ref(params, x, config))
    assert out.shape == (batch, outputs)
    # bf16 MXU inputs (f32 accumulation) -> relaxed tolerance vs the f32 reference.
    assert jnp.allclose(out, ref, rtol=2e-2, atol=2e-2), "mismatch vs reference"

    print("KERNEL_OK")
</pallas_src>

<mosaic_0001>
module attributes {stable_mosaic.version = 11 : i64} {
  func.func @_fused_dqn_kernel(%arg0: memref<160x128xf32, #tpu.memory_space<vmem>>, %arg1: memref<9x128x128xbf16, #tpu.memory_space<vmem>>, %arg2: memref<768x128xbf16, #tpu.memory_space<vmem>>, %arg3: memref<1x640xf32, #tpu.memory_space<vmem>>, %arg4: memref<8x128xf32, #tpu.memory_space<vmem>>, %arg5: memref<72x128xf32, #tpu.memory_space<vmem>>, %arg6: memref<56x128xf32, #tpu.memory_space<vmem>>, %arg7: memref<40x128xf32, #tpu.memory_space<vmem>>) attributes {dimension_semantics = [], scalar_prefetch = 0 : i64, scratch_operands = 3 : i64, tpu.core_type = #tpu.core_type<tc>} {
    %c0 = arith.constant 0 : index
    %c0_0 = arith.constant 0 : index
    %0 = vector.load %arg0[%c0, %c0_0] : memref<160x128xf32, #tpu.memory_space<vmem>>, vector<72x128xf32>
    %1 = arith.truncf %0 : vector<72x128xf32> to vector<72x128xbf16>
    %c0_1 = arith.constant 0 : index
    %c0_2 = arith.constant 0 : index
    %c0_3 = arith.constant 0 : index
    %2 = vector.load %arg1[%c0_1, %c0_2, %c0_3] : memref<9x128x128xbf16, #tpu.memory_space<vmem>>, vector<1x128x128xbf16>
    %3 = vector.shape_cast %2 : vector<1x128x128xbf16> to vector<128x128xbf16>
    %cst = arith.constant dense<0.000000e+00> : vector<72x128xf32>
    %4 = tpu.matmul %1, %3, %cst {dimension_numbers = #tpu.dot_dimension_numbers<[1], [0], [0], [1], [0, 0, 1, 1], [], []>} : vector<72x128xbf16>, vector<128x128xbf16>, vector<72x128xf32> -> vector<72x128xf32>
    %c0_4 = arith.constant 0 : index
    %c0_5 = arith.constant 0 : index
    %5 = vector.load %arg3[%c0_4, %c0_5] : memref<1x640xf32, #tpu.memory_space<vmem>>, vector<1x128xf32>
    %6 = vector.broadcast %5 : vector<1x128xf32> to vector<72x128xf32>
    %7 = arith.addf %4, %6 : vector<72x128xf32>
    %c80 = arith.constant 80 : index
    %c0_6 = arith.constant 0 : index
    %8 = vector.load %arg0[%c80, %c0_6] : memref<160x128xf32, #tpu.memory_space<vmem>>, vector<72x128xf32>
    %9 = arith.truncf %8 : vector<72x128xf32> to vector<72x128xbf16>
    %c1 = arith.constant 1 : index
    %c0_7 = arith.constant 0 : index
    %c0_8 = arith.constant 0 : index
    %10 = vector.load %arg1[%c1, %c0_7, %c0_8] : memref<9x128x128xbf16, #tpu.memory_space<vmem>>, vector<1x128x128xbf16>
    %11 = vector.shape_cast %10 : vector<1x128x128xbf16> to vector<128x128xbf16>
    %cst_9 = arith.constant dense<0.000000e+00> : vector<72x128xf32>
    %12 = tpu.matmul %9, %11, %cst_9 {dimension_numbers = #tpu.dot_dimension_numbers<[1], [0], [0], [1], [0, 0, 1, 1], [], []>} : vector<72x128xbf16>, vector<128x128xbf16>, vector<72x128xf32> -> vector<72x128xf32>
    %13 = arith.addf %7, %12 : vector<72x128xf32>
    %c8 = arith.constant 8 : index
    %c0_10 = arith.constant 0 : index
    %14 = vector.load %arg0[%c8, %c0_10] : memref<160x128xf32, #tpu.memory_space<vmem>>, vector<72x128xf32>
    %15 = arith.truncf %14 : vector<72x128xf32> to vector<72x128xbf16>
    %c2 = arith.constant 2 : index
    %c0_11 = arith.constant 0 : index
    %c0_12 = arith.constant 0 : index
    %16 = vector.load %arg1[%c2, %c0_11, %c0_12] : memref<9x128x128xbf16, #tpu.memory_space<vmem>>, vector<1x128x128xbf16>
    %17 = vector.shape_cast %16 : vector<1x128x128xbf16> to vector<128x128xbf16>
    %cst_13 = arith.constant dense<0.000000e+00> : vector<72x128xf32>
    %18 = tpu.matmul %15, %17, %cst_13 {dimension_numbers = #tpu.dot_dimension_numbers<[1], [0], [0], [1], [0, 0, 1, 1], [], []>} : vector<72x128xbf16>, vector<128x128xbf16>, vector<72x128xf32> -> vector<72x128xf32>
    %19 = arith.addf %13, %18 : vector<72x128xf32>
    %cst_14 = arith.constant 0.000000e+00 : f32
    %20 = vector.broadcast %cst_14 : f32 to vector<72x128xf32>
    %21 = arith.maximumf %19, %20 : vector<72x128xf32>
    %c0_15 = arith.constant 0 : index
    %c0_16 = arith.constant 0 : index
    %22 = vector.load %arg5[%c0_15, %c0_16] : memref<72x128xf32, #tpu.memory_space<vmem>>, vector<72x128xf32>
    tpu.vector_store %arg5[%c0_15, %c0_16], %21 {strides = array<i32>} : memref<72x128xf32, #tpu.memory_space<vmem>>, vector<72x128xf32>,
    %c0_17 = arith.constant 0 : index
    %c0_18 = arith.constant 0 : index
    %23 = vector.load %arg5[%c0_17, %c0_18] : memref<72x128xf32, #tpu.memory_space<vmem>>, vector<56x128xf32>
    %24 = arith.truncf %23 : vector<56x128xf32> to vector<56x128xbf16>
    %c3 = arith.constant 3 : index
    %c0_19 = arith.constant 0 : index
    %c0_20 = arith.constant 0 : index
    %25 = vector.load %arg1[%c3, %c0_19, %c0_20] : memref<9x128x128xbf16, #tpu.memory_space<vmem>>, vector<1x128x128xbf16>
    %26 = vector.shape_cast %25 : vector<1x128x128xbf16> to vector<128x128xbf16>
    %cst_21 = arith.constant dense<0.000000e+00> : vector<56x128xf32>
    %27 = tpu.matmul %24, %26, %cst_21 {dimension_numbers = #tpu.dot_dimension_numbers<[1], [0], [0], [1], [0, 0, 1, 1], [], []>} : vector<56x128xbf16>, vector<128x128xbf16>, vector<56x128xf32> -> vector<56x128xf32>
    %c0_22 = arith.constant 0 : index
    %c128 = arith.constant 128 : index
    %28 = vector.load %arg3[%c0_22, %c128] : memref<1x640xf32, #tpu.memory_space<vmem>>, vector<1x128xf32>
    %29 = vector.broadcast %28 : vector<1x128xf32> to vector<56x128xf32>
    %30 = arith.addf %27, %29 : vector<56x128xf32>
    %c8_23 = arith.constant 8 : index
    %c0_24 = arith.constant 0 : index
    %31 = vector.load %arg5[%c8_23, %c0_24] : memref<72x128xf32, #tpu.memory_space<vmem>>, vector<56x128xf32>
    %32 = arith.truncf %31 : vector<56x128xf32> to vector<56x128xbf16>
    %c4 = arith.constant 4 : index
    %c0_25 = arith.constant 0 : index
    %c0_26 = arith.constant 0 : index
    %33 = vector.load %arg1[%c4, %c0_25, %c0_26] : memref<9x128x128xbf16, #tpu.memory_space<vmem>>, vector<1x128x128xbf16>
    %34 = vector.shape_cast %33 : vector<1x128x128xbf16> to vector<128x128xbf16>
    %cst_27 = arith.constant dense<0.000000e+00> : vector<56x128xf32>
    %35 = tpu.matmul %32, %34, %cst_27 {dimension_numbers = #tpu.dot_dimension_numbers<[1], [0], [0], [1], [0, 0, 1, 1], [], []>} : vector<56x128xbf16>, vector<128x128xbf16>, vector<56x128xf32> -> vector<56x128xf32>
    %36 = arith.addf %30, %35 : vector<56x128xf32>
    %c16 = arith.constant 16 : index
    %c0_28 = arith.constant 0 : index
    %37 = vector.load %arg5[%c16, %c0_28] : memref<72x128xf32, #tpu.memory_space<vmem>>, vector<56x128xf32>
    %38 = arith.truncf %37 : vector<56x128xf32> to vector<56x128xbf16>
    %c5 = arith.constant 5 : index
    %c0_29 = arith.constant 0 : index
    %c0_30 = arith.constant 0 : index
    %39 = vector.load %arg1[%c5, %c0_29, %c0_30] : memref<9x128x128xbf16, #tpu.memory_space<vmem>>, vector<1x128x128xbf16>
    %40 = vector.shape_cast %39 : vector<1x128x128xbf16> to vector<128x128xbf16>
    %cst_31 = arith.constant dense<0.000000e+00> : vector<56x128xf32>
    %41 = tpu.matmul %38, %40, %cst_31 {dimension_numbers = #tpu.dot_dimension_numbers<[1], [0], [0], [1], [0, 0, 1, 1], [], []>} : vector<56x128xbf16>, vector<128x128xbf16>, vector<56x128xf32> -> vector<56x128xf32>
    %42 = arith.addf %36, %41 : vector<56x128xf32>
    %cst_32 = arith.constant 0.000000e+00 : f32
    %43 = vector.broadcast %cst_32 : f32 to vector<56x128xf32>
    %44 = arith.maximumf %42, %43 : vector<56x128xf32>
    %c0_33 = arith.constant 0 : index
    %c0_34 = arith.constant 0 : index
    %45 = vector.load %arg6[%c0_33, %c0_34] : memref<56x128xf32, #tpu.memory_space<vmem>>, vector<56x128xf32>
    tpu.vector_store %arg6[%c0_33, %c0_34], %44 {strides = array<i32>} : memref<56x128xf32, #tpu.memory_space<vmem>>, vector<56x128xf32>,
    %c0_35 = arith.constant 0 : index
    %c0_36 = arith.constant 0 : index
    %46 = vector.load %arg6[%c0_35, %c0_36] : memref<56x128xf32, #tpu.memory_space<vmem>>, vector<40x128xf32>
    %47 = arith.truncf %46 : vector<40x128xf32> to vector<40x128xbf16>
    %c6 = arith.constant 6 : index
    %c0_37 = arith.constant 0 : index
    %c0_38 = arith.constant 0 : index
    %48 = vector.load %arg1[%c6, %c0_37, %c0_38] : memref<9x128x128xbf16, #tpu.memory_space<vmem>>, vector<1x128x128xbf16>
    %49 = vector.shape_cast %48 : vector<1x128x128xbf16> to vector<128x128xbf16>
    %cst_39 = arith.constant dense<0.000000e+00> : vector<40x128xf32>
    %50 = tpu.matmul %47, %49, %cst_39 {dimension_numbers = #tpu.dot_dimension_numbers<[1], [0], [0], [1], [0, 0, 1, 1], [], []>} : vector<40x128xbf16>, vector<128x128xbf16>, vector<40x128xf32> -> vector<40x128xf32>
    %c0_40 = arith.constant 0 : index
    %c256 = arith.constant 256 : index
    %51 = vector.load %arg3[%c0_40, %c256] : memref<1x640xf32, #tpu.memory_space<vmem>>, vector<1x128xf32>
    %52 = vector.broadcast %51 : vector<1x128xf32> to vector<40x128xf32>
    %53 = arith.addf %50, %52 : vector<40x128xf32>
    %c8_41 = arith.constant 8 : index
    %c0_42 = arith.constant 0 : index
    %54 = vector.load %arg6[%c8_41, %c0_42] : memref<56x128xf32, #tpu.memory_space<vmem>>, vector<40x128xf32>
    %55 = arith.truncf %54 : vector<40x128xf32> to vector<40x128xbf16>
    %c7 = arith.constant 7 : index
    %c0_43 = arith.constant 0 : index
    %c0_44 = arith.constant 0 : index
    %56 = vector.load %arg1[%c7, %c0_43, %c0_44] : memref<9x128x128xbf16, #tpu.memory_space<vmem>>, vector<1x128x128xbf16>
    %57 = vector.shape_cast %56 : vector<1x128x128xbf16> to vector<128x128xbf16>
    %cst_45 = arith.constant dense<0.000000e+00> : vector<40x128xf32>
    %58 = tpu.matmul %55, %57, %cst_45 {dimension_numbers = #tpu.dot_dimension_numbers<[1], [0], [0], [1], [0, 0, 1, 1], [], []>} : vector<40x128xbf16>, vector<128x128xbf16>, vector<40x128xf32> -> vector<40x128xf32>
    %59 = arith.addf %53, %58 : vector<40x128xf32>
    %c16_46 = arith.constant 16 : index
    %c0_47 = arith.constant 0 : index
    %60 = vector.load %arg6[%c16_46, %c0_47] : memref<56x128xf32, #tpu.memory_space<vmem>>, vector<40x128xf32>
    %61 = arith.truncf %60 : vector<40x128xf32> to vector<40x128xbf16>
    %c8_48 = arith.constant 8 : index
    %c0_49 = arith.constant 0 : index
    %c0_50 = arith.constant 0 : index
    %62 = vector.load %arg1[%c8_48, %c0_49, %c0_50] : memref<9x128x128xbf16, #tpu.memory_space<vmem>>, vector<1x128x128xbf16>
    %63 = vector.shape_cast %62 : vector<1x128x128xbf16> to vector<128x128xbf16>
    %cst_51 = arith.constant dense<0.000000e+00> : vector<40x128xf32>
    %64 = tpu.matmul %61, %63, %cst_51 {dimension_numbers = #tpu.dot_dimension_numbers<[1], [0], [0], [1], [0, 0, 1, 1], [], []>} : vector<40x128xbf16>, vector<128x128xbf16>, vector<40x128xf32> -> vector<40x128xf32>
    %65 = arith.addf %59, %64 : vector<40x128xf32>
    %cst_52 = arith.constant 0.000000e+00 : f32
    %66 = vector.broadcast %cst_52 : f32 to vector<40x128xf32>
    %67 = arith.maximumf %65, %66 : vector<40x128xf32>
    %c0_53 = arith.constant 0 : index
    %c0_54 = arith.constant 0 : index
    %68 = vector.load %arg7[%c0_53, %c0_54] : memref<40x128xf32, #tpu.memory_space<vmem>>, vector<40x128xf32>
    tpu.vector_store %arg7[%c0_53, %c0_54], %67 {strides = array<i32>} : memref<40x128xf32, #tpu.memory_space<vmem>>, vector<40x128xf32>,
    %c0_55 = arith.constant 0 : index
    %c0_56 = arith.constant 0 : index
    %69 = vector.load %arg7[%c0_55, %c0_56] : memref<40x128xf32, #tpu.memory_space<vmem>>, vector<8x128xf32>
    %70 = arith.truncf %69 : vector<8x128xf32> to vector<8x128xbf16>
    %c0_57 = arith.constant 0 : index
    %c0_58 = arith.constant 0 : index
    %71 = vector.load %arg2[%c0_57, %c0_58] : memref<768x128xbf16, #tpu.memory_space<vmem>>, vector<128x128xbf16>
    %cst_59 = arith.constant dense<0.000000e+00> : vector<8x128xf32>
    %72 = tpu.matmul %70, %71, %cst_59 {dimension_numbers = #tpu.dot_dimension_numbers<[1], [0], [0], [1], [0, 0, 1, 1], [], []>} : vector<8x128xbf16>, vector<128x128xbf16>, vector<8x128xf32> -> vector<8x128xf32>
    %c0_60 = arith.constant 0 : index
    %c384 = arith.constant 384 : index
    %73 = vector.load %arg3[%c0_60, %c384] : memref<1x640xf32, #tpu.memory_space<vmem>>, vector<1x128xf32>
    %74 = vector.broadcast %73 : vector<1x128xf32> to vector<8x128xf32>
    %75 = arith.addf %72, %74 : vector<8x128xf32>
    %c8_61 = arith.constant 8 : index
    %c0_62 = arith.constant 0 : index
    %76 = vector.load %arg7[%c8_61, %c0_62] : memref<40x128xf32, #tpu.memory_space<vmem>>, vector<8x128xf32>
    %77 = arith.truncf %76 : vector<8x128xf32> to vector<8x128xbf16>
    %c128_63 = arith.constant 128 : index
    %c0_64 = arith.constant 0 : index
    %78 = vector.load %arg2[%c128_63, %c0_64] : memref<768x128xbf16, #tpu.memory_space<vmem>>, vector<128x128xbf16>
    %cst_65 = arith.constant dense<0.000000e+00> : vector<8x128xf32>
    %79 = tpu.matmul %77, %78, %cst_65 {dimension_numbers = #tpu.dot_dimension_numbers<[1], [0], [0], [1], [0, 0, 1, 1], [], []>} : vector<8x128xbf16>, vector<128x128xbf16>, vector<8x128xf32> -> vector<8x128xf32>
    %80 = arith.addf %75, %79 : vector<8x128xf32>
    %c16_66 = arith.constant 16 : index
    %c0_67 = arith.constant 0 : index
    %81 = vector.load %arg7[%c16_66, %c0_67] : memref<40x128xf32, #tpu.memory_space<vmem>>, vector<8x128xf32>
    %82 = arith.truncf %81 : vector<8x128xf32> to vector<8x128xbf16>
    %c256_68 = arith.constant 256 : index
    %c0_69 = arith.constant 0 : index
    %83 = vector.load %arg2[%c256_68, %c0_69] : memref<768x128xbf16, #tpu.memory_space<vmem>>, vector<128x128xbf16>
    %cst_70 = arith.constant dense<0.000000e+00> : vector<8x128xf32>
    %84 = tpu.matmul %82, %83, %cst_70 {dimension_numbers = #tpu.dot_dimension_numbers<[1], [0], [0], [1], [0, 0, 1, 1], [], []>} : vector<8x128xbf16>, vector<128x128xbf16>, vector<8x128xf32> -> vector<8x128xf32>
    %85 = arith.addf %80, %84 : vector<8x128xf32>
    %c24 = arith.constant 24 : index
    %c0_71 = arith.constant 0 : index
    %86 = vector.load %arg7[%c24, %c0_71] : memref<40x128xf32, #tpu.memory_space<vmem>>, vector<8x128xf32>
    %87 = arith.truncf %86 : vector<8x128xf32> to vector<8x128xbf16>
    %c384_72 = arith.constant 384 : index
    %c0_73 = arith.constant 0 : index
    %88 = vector.load %arg2[%c384_72, %c0_73] : memref<768x128xbf16, #tpu.memory_space<vmem>>, vector<128x128xbf16>
    %cst_74 = arith.constant dense<0.000000e+00> : vector<8x128xf32>
    %89 = tpu.matmul %87, %88, %cst_74 {dimension_numbers = #tpu.dot_dimension_numbers<[1], [0], [0], [1], [0, 0, 1, 1], [], []>} : vector<8x128xbf16>, vector<128x128xbf16>, vector<8x128xf32> -> vector<8x128xf32>
    %90 = arith.addf %85, %89 : vector<8x128xf32>
    %c32 = arith.constant 32 : index
    %c0_75 = arith.constant 0 : index
    %91 = vector.load %arg7[%c32, %c0_75] : memref<40x128xf32, #tpu.memory_space<vmem>>, vector<8x128xf32>
    %92 = arith.truncf %91 : vector<8x128xf32> to vector<8x128xbf16>
    %c512 = arith.constant 512 : index
    %c0_76 = arith.constant 0 : index
    %93 = vector.load %arg2[%c512, %c0_76] : memref<768x128xbf16, #tpu.memory_space<vmem>>, vector<128x128xbf16>
    %cst_77 = arith.constant dense<0.000000e+00> : vector<8x128xf32>
    %94 = tpu.matmul %92, %93, %cst_77 {dimension_numbers = #tpu.dot_dimension_numbers<[1], [0], [0], [1], [0, 0, 1, 1], [], []>} : vector<8x128xbf16>, vector<128x128xbf16>, vector<8x128xf32> -> vector<8x128xf32>
    %95 = arith.addf %90, %94 : vector<8x128xf32>
    %cst_78 = arith.constant 0.000000e+00 : f32
    %96 = vector.broadcast %cst_78 : f32 to vector<8x128xf32>
    %97 = arith.maximumf %95, %96 : vector<8x128xf32>
    %98 = arith.truncf %97 : vector<8x128xf32> to vector<8x128xbf16>
    %c640 = arith.constant 640 : index
    %c0_79 = arith.constant 0 : index
    %99 = vector.load %arg2[%c640, %c0_79] : memref<768x128xbf16, #tpu.memory_space<vmem>>, vector<128x128xbf16>
    %cst_80 = arith.constant dense<0.000000e+00> : vector<8x128xf32>
    %100 = tpu.matmul %98, %99, %cst_80 {dimension_numbers = #tpu.dot_dimension_numbers<[1], [0], [0], [1], [0, 0, 1, 1], [], []>} : vector<8x128xbf16>, vector<128x128xbf16>, vector<8x128xf32> -> vector<8x128xf32>
    %c0_81 = arith.constant 0 : index
    %c512_82 = arith.constant 512 : index
    %101 = vector.load %arg3[%c0_81, %c512_82] : memref<1x640xf32, #tpu.memory_space<vmem>>, vector<1x128xf32>
    %102 = vector.broadcast %101 : vector<1x128xf32> to vector<8x128xf32>
    %103 = arith.addf %100, %102 : vector<8x128xf32>
    %c0_83 = arith.constant 0 : index
    %c0_84 = arith.constant 0 : index
    %104 = vector.load %arg4[%c0_83, %c0_84] : memref<8x128xf32, #tpu.memory_space<vmem>>, vector<8x128xf32>
    tpu.vector_store %arg4[%c0_83, %c0_84], %103 {strides = array<i32>} : memref<8x128xf32, #tpu.memory_space<vmem>>, vector<8x128xf32>,
    return
  }
}

</mosaic_0001>

<llo_original>
// kernel: dqn_forward.1
$region0: #{dqn_forward.1}
  #allocation0 [shape = 'u32[]', space=smem, size = 0x4, offset = 0x4, fixed_abs, tag = 'smem constant byte address 0x4 - core index']
  #allocation1 [shape = 'u32[72,128]{1,0:T(1,128)}', space=vmem, size = 0x9000, scoped, tag = 'internal scratch']
  #allocation2 [shape = 'f32[72,128]{1,0:T(8,128)}', space=vmem, size = 0x9000, scoped, tag = 'scratch operand']
  #allocation3 [shape = 'f32[56,128]{1,0:T(8,128)}', space=vmem, size = 0x7000, scoped, tag = 'scratch operand']
  #allocation4 [shape = 'f32[40,128]{1,0:T(8,128)}', space=vmem, size = 0x5000, scoped, tag = 'scratch operand']
  %s0 = inlined_call_operand.vmem [shape: f32[160,128], index: 0, kind: input, shape index: {}]
  %s1 = inlined_call_operand.vmem [shape: bf16[9,128,128], index: 1, kind: input, shape index: {}]
  %s2 = inlined_call_operand.vmem [shape: bf16[768,128], index: 2, kind: input, shape index: {}]
  %s3 = inlined_call_operand.vmem [shape: f32[1,640], index: 3, kind: input, shape index: {}]
  %s4 = inlined_call_operand.vmem [shape: f32[8,128], index: 4, kind: output, shape index: {}]
  %s5 = sld [smem:[#allocation0]]
  $region26: #{dqn_forward.1} parent=0
    _
  %s7 = ssub.s32 1, %s5
  %s8 = scalar_select 0, %s7, %s5
  // Predicated region
  $region2: #{dqn_forward.1} parent=0 // pred_check
    _
  $region3: #{dqn_forward.1} parent=0 // pred_check_branch
    %10 = sbr.rel (0) target = $region5
  $region4: #{dqn_forward.1} parent=0 // pred_region
    _
  $region5: #{dqn_forward.1} parent=0 // pred_fallthru
    _
  // Predicated region
  $region6: #{dqn_forward.1} parent=0 // pred_check
    _
  $region7: #{dqn_forward.1} parent=0 // pred_check_branch
    %12 = sbr.rel (0) target = $region9
  $region8: #{dqn_forward.1} parent=0 // pred_region
    _
  $region9: #{dqn_forward.1} parent=0 // pred_fallthru
    _
  // Predicated region
  $region10: #{dqn_forward.1} parent=0 // pred_check
    _
  $region11: #{dqn_forward.1} parent=0 // pred_check_branch
    %14 = sbr.rel (0) target = $region13
  $region12: #{dqn_forward.1} parent=0 // pred_region
    _
  $region13: #{dqn_forward.1} parent=0 // pred_fallthru
    _
  // Predicated region
  $region14: #{dqn_forward.1} parent=0 // pred_check
    _
  $region15: #{dqn_forward.1} parent=0 // pred_check_branch
    %16 = sbr.rel (0) target = $region17
  $region16: #{dqn_forward.1} parent=0 // pred_region
    _
  $region17: #{dqn_forward.1} parent=0 // pred_fallthru
    _
  %v17 = vld [vmem:[%s0] sm:$0xff]
  %v18 = vld [vmem:[%s0 + $0x8] sm:$0xff]
  %v19 = vld [vmem:[%s0 + $0x10] sm:$0xff]
  %v20 = vld [vmem:[%s0 + $0x18] sm:$0xff]
  %v21 = vld [vmem:[%s0 + $0x20] sm:$0xff]
  %v22 = vld [vmem:[%s0 + $0x28] sm:$0xff]
  %v23 = vld [vmem:[%s0 + $0x30] sm:$0xff]
  %v24 = vld [vmem:[%s0 + $0x38] sm:$0xff]
  %v25 = vld [vmem:[%s0 + $0x40] sm:$0xff]
  %v26 = vpack.c.bf16 %v18, %v17
  %v27 = vpack.c.bf16 %v20, %v19
  %v28 = vpack.c.bf16 %v22, %v21
  %v29 = vpack.c.bf16 %v24, %v23
  %v30 = vpack.c.bf16 %v25, %v25
  %v31 = vld [vmem:[%s1] sm:$0xf]
  %v32 = vld [vmem:[%s1 + $0x4] sm:$0xf]
  %v33 = vld [vmem:[%s1 + $0x8] sm:$0xf]
  %v34 = vld [vmem:[%s1 + $0xc] sm:$0xf]
  %v35 = vld [vmem:[%s1 + $0x10] sm:$0xf]
  %v36 = vld [vmem:[%s1 + $0x14] sm:$0xf]
  %v37 = vld [vmem:[%s1 + $0x18] sm:$0xf]
  %v38 = vld [vmem:[%s1 + $0x1c] sm:$0xf]
  %v39 = vld [vmem:[%s1 + $0x20] sm:$0xf]
  %v40 = vld [vmem:[%s1 + $0x24] sm:$0xf]
  %v41 = vld [vmem:[%s1 + $0x28] sm:$0xf]
  %v42 = vld [vmem:[%s1 + $0x2c] sm:$0xf]
  %v43 = vld [vmem:[%s1 + $0x30] sm:$0xf]
  %v44 = vld [vmem:[%s1 + $0x34] sm:$0xf]
  %v45 = vld [vmem:[%s1 + $0x38] sm:$0xf]
  %v46 = vld [vmem:[%s1 + $0x3c] sm:$0xf]
  %v47 = vld [vmem:[%s3] sm:$0x1]
  %v49 = vperm.slane %v47, 0
  %v67 = vunpack.c.l.b16 %v31
  %v68 = vunpack.c.l.b16 %v32
  %v69 = vunpack.c.l.b16 %v33
  %v70 = vunpack.c.l.b16 %v34
  %v71 = vunpack.c.l.b16 %v35
  %v72 = vunpack.c.l.b16 %v36
  %v73 = vunpack.c.l.b16 %v37
  %v74 = vunpack.c.l.b16 %v38
  %v75 = vunpack.c.l.b16 %v39
  %v76 = vunpack.c.l.b16 %v40
  %v77 = vunpack.c.l.b16 %v41
  %v78 = vunpack.c.l.b16 %v42
  %v79 = vunpack.c.l.b16 %v43
  %v80 = vunpack.c.l.b16 %v44
  %v81 = vunpack.c.l.b16 %v45
  %v82 = vunpack.c.l.b16 %v46
  %v83 = vpack.c.b16 %v68, %v67
  %v84 = vpack.c.b16 %v70, %v69
  %v85 = vpack.c.b16 %v72, %v71
  %v86 = vpack.c.b16 %v74, %v73
  %v87 = vpack.c.b16 %v76, %v75
  %v88 = vpack.c.b16 %v78, %v77
  %v89 = vpack.c.b16 %v80, %v79
  %v90 = vpack.c.b16 %v82, %v81
  %99 = vmatpush.bf16.msra.mxu0 %v90
  %100 = vmatpush.bf16.msra.mxu0 %v89
  %101 = vmatpush.bf16.msra.mxu0 %v88
  %102 = vmatpush.bf16.msra.mxu0 %v87
  %103 = vmatpush.bf16.msra.mxu0 %v86
  %104 = vmatpush.bf16.msra.mxu0 %v85
  %105 = vmatpush.bf16.msra.mxu0 %v84
  %106 = vmatpush.bf16.msra.mxu0 %v83
  %107 = vmatmul.bf16.gmra.mxu0 %v26
  %v108 = vpop.f32.mrf.mxu0
  %v109 = vadd.f32 %v49, %v108
  %v110 = vpop.f32.mrf.mxu0
  %v111 = vadd.f32 %v49, %v110
  %112 = vmatmul.bf16.gmra.mxu0 %v27
  %v113 = vpop.f32.mrf.mxu0
  %v114 = vadd.f32 %v49, %v113
  %v115 = vpop.f32.mrf.mxu0
  %v116 = vadd.f32 %v49, %v115
  %117 = vmatmul.bf16.gmra.mxu0 %v28
  %v118 = vpop.f32.mrf.mxu0
  %v119 = vadd.f32 %v49, %v118
  %v120 = vpop.f32.mrf.mxu0
  %v121 = vadd.f32 %v49, %v120
  %122 = vmatmul.bf16.gmra.mxu0 %v29
  %v123 = vpop.f32.mrf.mxu0
  %v124 = vadd.f32 %v49, %v123
  %v125 = vpop.f32.mrf.mxu0
  %v126 = vadd.f32 %v49, %v125
  %127 = vmatmul.bf16.gmra.mxu0 %v30
  %v128 = vpop.f32.mrf.mxu0
  %v129 = vadd.f32 %v49, %v128
  %v130 = vpop.f32.mrf.mxu0
  %131 = vdwg.mxu0
  %v132 = vld [vmem:[%s0 + $0x50] sm:$0xff]
  %v133 = vld [vmem:[%s0 + $0x58] sm:$0xff]
  %v134 = vld [vmem:[%s0 + $0x60] sm:$0xff]
  %v135 = vld [vmem:[%s0 + $0x68] sm:$0xff]
  %v136 = vld [vmem:[%s0 + $0x70] sm:$0xff]
  %v137 = vld [vmem:[%s0 + $0x78] sm:$0xff]
  %v138 = vld [vmem:[%s0 + $0x80] sm:$0xff]
  %v139 = vld [vmem:[%s0 + $0x88] sm:$0xff]
  %v140 = vld [vmem:[%s0 + $0x90] sm:$0xff]
  %v141 = vpack.c.bf16 %v133, %v132
  %v142 = vpack.c.bf16 %v135, %v134
  %v143 = vpack.c.bf16 %v137, %v136
  %v144 = vpack.c.bf16 %v139, %v138
  %v145 = vpack.c.bf16 %v140, %v140
  %s146 = scalar_lea.vmem %s1, 64
  %v147 = vld [vmem:[%s146] sm:$0xf]
  %v148 = vld [vmem:[%s146 + $0x4] sm:$0xf]
  %v149 = vld [vmem:[%s146 + $0x8] sm:$0xf]
  %v150 = vld [vmem:[%s146 + $0xc] sm:$0xf]
  %v151 = vld [vmem:[%s146 + $0x10] sm:$0xf]
  %v152 = vld [vmem:[%s146 + $0x14] sm:$0xf]
  %v153 = vld [vmem:[%s146 + $0x18] sm:$0xf]
  %v154 = vld [vmem:[%s146 + $0x1c] sm:$0xf]
  %v155 = vld [vmem:[%s146 + $0x20] sm:$0xf]
  %v156 = vld [vmem:[%s146 + $0x24] sm:$0xf]
  %v157 = vld [vmem:[%s146 + $0x28] sm:$0xf]
  %v158 = vld [vmem:[%s146 + $0x2c] sm:$0xf]
  %v159 = vld [vmem:[%s146 + $0x30] sm:$0xf]
  %v160 = vld [vmem:[%s146 + $0x34] sm:$0xf]
  %v161 = vld [vmem:[%s146 + $0x38] sm:$0xf]
  %v162 = vld [vmem:[%s146 + $0x3c] sm:$0xf]
  %v179 = vunpack.c.l.b16 %v147
  %v180 = vunpack.c.l.b16 %v148
  %v181 = vunpack.c.l.b16 %v149
  %v182 = vunpack.c.l.b16 %v150
  %v183 = vunpack.c.l.b16 %v151
  %v184 = vunpack.c.l.b16 %v152
  %v185 = vunpack.c.l.b16 %v153
  %v186 = vunpack.c.l.b16 %v154
  %v187 = vunpack.c.l.b16 %v155
  %v188 = vunpack.c.l.b16 %v156
  %v189 = vunpack.c.l.b16 %v157
  %v190 = vunpack.c.l.b16 %v158
  %v191 = vunpack.c.l.b16 %v159
  %v192 = vunpack.c.l.b16 %v160
  %v193 = vunpack.c.l.b16 %v161
  %v194 = vunpack.c.l.b16 %v162
  %v195 = vpack.c.b16 %v180, %v179
  %v196 = vpack.c.b16 %v182, %v181
  %v197 = vpack.c.b16 %v184, %v183
  %v198 = vpack.c.b16 %v186, %v185
  %v199 = vpack.c.b16 %v188, %v187
  %v200 = vpack.c.b16 %v190, %v189
  %v201 = vpack.c.b16 %v192, %v191
  %v202 = vpack.c.b16 %v194, %v193
  %211 = vmatpush.bf16.msra.mxu0 %v202
  %212 = vmatpush.bf16.msra.mxu0 %v201
  %213 = vmatpush.bf16.msra.mxu0 %v200
  %214 = vmatpush.bf16.msra.mxu0 %v199
  %215 = vmatpush.bf16.msra.mxu0 %v198
  %216 = vmatpush.bf16.msra.mxu0 %v197
  %217 = vmatpush.bf16.msra.mxu0 %v196
  %218 = vmatpush.bf16.msra.mxu0 %v195
  %219 = vmatmul.bf16.gmra.mxu0 %v141
  %v220 = vpop.f32.mrf.mxu0
  %v221 = vadd.f32 0.0, %v220
  %v222 = vpop.f32.mrf.mxu0
  %v223 = vadd.f32 0.0, %v222
  %224 = vmatmul.bf16.gmra.mxu0 %v142
  %v225 = vpop.f32.mrf.mxu0
  %v226 = vadd.f32 0.0, %v225
  %v227 = vpop.f32.mrf.mxu0
  %v228 = vadd.f32 0.0, %v227
  %229 = vmatmul.bf16.gmra.mxu0 %v143
  %v230 = vpop.f32.mrf.mxu0
  %v231 = vadd.f32 0.0, %v230
  %v232 = vpop.f32.mrf.mxu0
  %v233 = vadd.f32 0.0, %v232
  %234 = vmatmul.bf16.gmra.mxu0 %v144
  %v235 = vpop.f32.mrf.mxu0
  %v236 = vadd.f32 0.0, %v235
  %v237 = vpop.f32.mrf.mxu0
  %v238 = vadd.f32 0.0, %v237
  %239 = vmatmul.bf16.gmra.mxu0 %v145
  %v240 = vpop.f32.mrf.mxu0
  %v241 = vadd.f32 0.0, %v240
  %v242 = vpop.f32.mrf.mxu0
  %243 = vdwg.mxu0
  %v244 = vadd.f32 %v109, %v221
  %v245 = vadd.f32 %v111, %v223
  %v246 = vadd.f32 %v114, %v226
  %v247 = vadd.f32 %v116, %v228
  %v248 = vadd.f32 %v119, %v231
  %v249 = vadd.f32 %v121, %v233
  %v250 = vadd.f32 %v124, %v236
  %v251 = vadd.f32 %v126, %v238
  %v252 = vadd.f32 %v129, %v241
  %v253 = vld [vmem:[%s0 + $0x8] sm:$0xff]
  %v254 = vld [vmem:[%s0 + $0x10] sm:$0xff]
  %v255 = vld [vmem:[%s0 + $0x18] sm:$0xff]
  %v256 = vld [vmem:[%s0 + $0x20] sm:$0xff]
  %v257 = vld [vmem:[%s0 + $0x28] sm:$0xff]
  %v258 = vld [vmem:[%s0 + $0x30] sm:$0xff]
  %v259 = vld [vmem:[%s0 + $0x38] sm:$0xff]
  %v260 = vld [vmem:[%s0 + $0x40] sm:$0xff]
  %v261 = vld [vmem:[%s0 + $0x48] sm:$0xff]
  %v262 = vpack.c.bf16 %v254, %v253
  %v263 = vpack.c.bf16 %v256, %v255
  %v264 = vpack.c.bf16 %v258, %v257
  %v265 = vpack.c.bf16 %v260, %v259
  %v266 = vpack.c.bf16 %v261, %v261
  %s267 = scalar_lea.vmem %s1, 128
  %v268 = vld [vmem:[%s267] sm:$0xf]
  %v269 = vld [vmem:[%s267 + $0x4] sm:$0xf]
  %v270 = vld [vmem:[%s267 + $0x8] sm:$0xf]
  %v271 = vld [vmem:[%s267 + $0xc] sm:$0xf]
  %v272 = vld [vmem:[%s267 + $0x10] sm:$0xf]
  %v273 = vld [vmem:[%s267 + $0x14] sm:$0xf]
  %v274 = vld [vmem:[%s267 + $0x18] sm:$0xf]
  %v275 = vld [vmem:[%s267 + $0x1c] sm:$0xf]
  %v276 = vld [vmem:[%s267 + $0x20] sm:$0xf]
  %v277 = vld [vmem:[%s267 + $0x24] sm:$0xf]
  %v278 = vld [vmem:[%s267 + $0x28] sm:$0xf]
  %v279 = vld [vmem:[%s267 + $0x2c] sm:$0xf]
  %v280 = vld [vmem:[%s267 + $0x30] sm:$0xf]
  %v281 = vld [vmem:[%s267 + $0x34] sm:$0xf]
  %v282 = vld [vmem:[%s267 + $0x38] sm:$0xf]
  %v283 = vld [vmem:[%s267 + $0x3c] sm:$0xf]
  %v300 = vunpack.c.l.b16 %v268
  %v301 = vunpack.c.l.b16 %v269
  %v302 = vunpack.c.l.b16 %v270
  %v303 = vunpack.c.l.b16 %v271
  %v304 = vunpack.c.l.b16 %v272
  %v305 = vunpack.c.l.b16 %v273
  %v306 = vunpack.c.l.b16 %v274
  %v307 = vunpack.c.l.b16 %v275
  %v308 = vunpack.c.l.b16 %v276
  %v309 = vunpack.c.l.b16 %v277
  %v310 = vunpack.c.l.b16 %v278
  %v311 = vunpack.c.l.b16 %v279
  %v312 = vunpack.c.l.b16 %v280
  %v313 = vunpack.c.l.b16 %v281
  %v314 = vunpack.c.l.b16 %v282
  %v315 = vunpack.c.l.b16 %v283
  %v316 = vpack.c.b16 %v301, %v300
  %v317 = vpack.c.b16 %v303, %v302
  %v318 = vpack.c.b16 %v305, %v304
  %v319 = vpack.c.b16 %v307, %v306
  %v320 = vpack.c.b16 %v309, %v308
  %v321 = vpack.c.b16 %v311, %v310
  %v322 = vpack.c.b16 %v313, %v312
  %v323 = vpack.c.b16 %v315, %v314
  %332 = vmatpush.bf16.msra.mxu0 %v323
  %333 = vmatpush.bf16.msra.mxu0 %v322
  %334 = vmatpush.bf16.msra.mxu0 %v321
  %335 = vmatpush.bf16.msra.mxu0 %v320
  %336 = vmatpush.bf16.msra.mxu0 %v319
  %337 = vmatpush.bf16.msra.mxu0 %v318
  %338 = vmatpush.bf16.msra.mxu0 %v317
  %339 = vmatpush.bf16.msra.mxu0 %v316
  %340 = vmatmul.bf16.gmra.mxu0 %v262
  %v341 = vpop.f32.mrf.mxu0
  %v342 = vadd.f32 0.0, %v341
  %v343 = vpop.f32.mrf.mxu0
  %v344 = vadd.f32 0.0, %v343
  %345 = vmatmul.bf16.gmra.mxu0 %v263
  %v346 = vpop.f32.mrf.mxu0
  %v347 = vadd.f32 0.0, %v346
  %v348 = vpop.f32.mrf.mxu0
  %v349 = vadd.f32 0.0, %v348
  %350 = vmatmul.bf16.gmra.mxu0 %v264
  %v351 = vpop.f32.mrf.mxu0
  %v352 = vadd.f32 0.0, %v351
  %v353 = vpop.f32.mrf.mxu0
  %v354 = vadd.f32 0.0, %v353
  %355 = vmatmul.bf16.gmra.mxu0 %v265
  %v356 = vpop.f32.mrf.mxu0
  %v357 = vadd.f32 0.0, %v356
  %v358 = vpop.f32.mrf.mxu0
  %v359 = vadd.f32 0.0, %v358
  %360 = vmatmul.bf16.gmra.mxu0 %v266
  %v361 = vpop.f32.mrf.mxu0
  %v362 = vadd.f32 0.0, %v361
  %v363 = vpop.f32.mrf.mxu0
  %364 = vdwg.mxu0
  %v365 = vadd.f32 %v244, %v342
  %v366 = vadd.f32 %v245, %v344
  %v367 = vadd.f32 %v246, %v347
  %v368 = vadd.f32 %v247, %v349
  %v369 = vadd.f32 %v248, %v352
  %v370 = vadd.f32 %v249, %v354
  %v371 = vadd.f32 %v250, %v357
  %v372 = vadd.f32 %v251, %v359
  %v373 = vadd.f32 %v252, %v362
  %v374 = vmax.f32 %v365, 0.0
  %v375 = vmax.f32 %v366, 0.0
  %v376 = vmax.f32 %v367, 0.0
  %v377 = vmax.f32 %v368, 0.0
  %v378 = vmax.f32 %v369, 0.0
  %v379 = vmax.f32 %v370, 0.0
  %v380 = vmax.f32 %v371, 0.0
  %v381 = vmax.f32 %v372, 0.0
  %v382 = vmax.f32 %v373, 0.0
  %383 = vst [vmem:[#allocation2] sm:$0xff] %v374
  %384 = vst [vmem:[#allocation2 + $0x8] sm:$0xff] %v375
  %385 = vst [vmem:[#allocation2 + $0x10] sm:$0xff] %v376
  %386 = vst [vmem:[#allocation2 + $0x18] sm:$0xff] %v377
  %387 = vst [vmem:[#allocation2 + $0x20] sm:$0xff] %v378
  %388 = vst [vmem:[#allocation2 + $0x28] sm:$0xff] %v379
  %389 = vst [vmem:[#allocation2 + $0x30] sm:$0xff] %v380
  %390 = vst [vmem:[#allocation2 + $0x38] sm:$0xff] %v381
  %391 = vst [vmem:[#allocation2 + $0x40] sm:$0xff] %v382
  %v392 = vld [vmem:[#allocation2] sm:$0xff]
  %v393 = vld [vmem:[#allocation2 + $0x8] sm:$0xff]
  %v394 = vld [vmem:[#allocation2 + $0x10] sm:$0xff]
  %v395 = vld [vmem:[#allocation2 + $0x18] sm:$0xff]
  %v396 = vld [vmem:[#allocation2 + $0x20] sm:$0xff]
  %v397 = vld [vmem:[#allocation2 + $0x28] sm:$0xff]
  %v398 = vld [vmem:[#allocation2 + $0x30] sm:$0xff]
  %v399 = vpack.c.bf16 %v393, %v392
  %v400 = vpack.c.bf16 %v395, %v394
  %v401 = vpack.c.bf16 %v397, %v396
  %v402 = vpack.c.bf16 %v398, %v398
  %s403 = scalar_lea.vmem %s1, 192
  %v404 = vld [vmem:[%s403] sm:$0xf]
  %v405 = vld [vmem:[%s403 + $0x4] sm:$0xf]
  %v406 = vld [vmem:[%s403 + $0x8] sm:$0xf]
  %v407 = vld [vmem:[%s403 + $0xc] sm:$0xf]
  %v408 = vld [vmem:[%s403 + $0x10] sm:$0xf]
  %v409 = vld [vmem:[%s403 + $0x14] sm:$0xf]
  %v410 = vld [vmem:[%s403 + $0x18] sm:$0xf]
  %v411 = vld [vmem:[%s403 + $0x1c] sm:$0xf]
  %v412 = vld [vmem:[%s403 + $0x20] sm:$0xf]
  %v413 = vld [vmem:[%s403 + $0x24] sm:$0xf]
  %v414 = vld [vmem:[%s403 + $0x28] sm:$0xf]
  %v415 = vld [vmem:[%s403 + $0x2c] sm:$0xf]
  %v416 = vld [vmem:[%s403 + $0x30] sm:$0xf]
  %v417 = vld [vmem:[%s403 + $0x34] sm:$0xf]
  %v418 = vld [vmem:[%s403 + $0x38] sm:$0xf]
  %v419 = vld [vmem:[%s403 + $0x3c] sm:$0xf]
  %v420 = vld [vmem:[%s3 + $0x1] sm:$0x1]
  %v422 = vperm.slane %v420, 0
  %v440 = vunpack.c.l.b16 %v404
  %v441 = vunpack.c.l.b16 %v405
  %v442 = vunpack.c.l.b16 %v406
  %v443 = vunpack.c.l.b16 %v407
  %v444 = vunpack.c.l.b16 %v408
  %v445 = vunpack.c.l.b16 %v409
  %v446 = vunpack.c.l.b16 %v410
  %v447 = vunpack.c.l.b16 %v411
  %v448 = vunpack.c.l.b16 %v412
  %v449 = vunpack.c.l.b16 %v413
  %v450 = vunpack.c.l.b16 %v414
  %v451 = vunpack.c.l.b16 %v415
  %v452 = vunpack.c.l.b16 %v416
  %v453 = vunpack.c.l.b16 %v417
  %v454 = vunpack.c.l.b16 %v418
  %v455 = vunpack.c.l.b16 %v419
  %v456 = vpack.c.b16 %v441, %v440
  %v457 = vpack.c.b16 %v443, %v442
  %v458 = vpack.c.b16 %v445, %v444
  %v459 = vpack.c.b16 %v447, %v446
  %v460 = vpack.c.b16 %v449, %v448
  %v461 = vpack.c.b16 %v451, %v450
  %v462 = vpack.c.b16 %v453, %v452
  %v463 = vpack.c.b16 %v455, %v454
  %472 = vmatpush.bf16.msra.mxu0 %v463
  %473 = vmatpush.bf16.msra.mxu0 %v462
  %474 = vmatpush.bf16.msra.mxu0 %v461
  %475 = vmatpush.bf16.msra.mxu0 %v460
  %476 = vmatpush.bf16.msra.mxu0 %v459
  %477 = vmatpush.bf16.msra.mxu0 %v458
  %478 = vmatpush.bf16.msra.mxu0 %v457
  %479 = vmatpush.bf16.msra.mxu0 %v456
  %480 = vmatmul.bf16.gmra.mxu0 %v399
  %v481 = vpop.f32.mrf.mxu0
  %v482 = vadd.f32 %v422, %v481
  %v483 = vpop.f32.mrf.mxu0
  %v484 = vadd.f32 %v422, %v483
  %485 = vmatmul.bf16.gmra.mxu0 %v400
  %v486 = vpop.f32.mrf.mxu0
  %v487 = vadd.f32 %v422, %v486
  %v488 = vpop.f32.mrf.mxu0
  %v489 = vadd.f32 %v422, %v488
  %490 = vmatmul.bf16.gmra.mxu0 %v401
  %v491 = vpop.f32.mrf.mxu0
  %v492 = vadd.f32 %v422, %v491
  %v493 = vpop.f32.mrf.mxu0
  %v494 = vadd.f32 %v422, %v493
  %495 = vmatmul.bf16.gmra.mxu0 %v402
  %v496 = vpop.f32.mrf.mxu0
  %v497 = vadd.f32 %v422, %v496
  %v498 = vpop.f32.mrf.mxu0
  %499 = vdwg.mxu0
  %v500 = vld [vmem:[#allocation2 + $0x8] sm:$0xff]
  %v501 = vld [vmem:[#allocation2 + $0x10] sm:$0xff]
  %v502 = vld [vmem:[#allocation2 + $0x18] sm:$0xff]
  %v503 = vld [vmem:[#allocation2 + $0x20] sm:$0xff]
  %v504 = vld [vmem:[#allocation2 + $0x28] sm:$0xff]
  %v505 = vld [vmem:[#allocation2 + $0x30] sm:$0xff]
  %v506 = vld [vmem:[#allocation2 + $0x38] sm:$0xff]
  %v507 = vpack.c.bf16 %v501, %v500
  %v508 = vpack.c.bf16 %v503, %v502
  %v509 = vpack.c.bf16 %v505, %v504
  %v510 = vpack.c.bf16 %v506, %v506
  %s511 = scalar_lea.vmem %s1, 256
  %v512 = vld [vmem:[%s511] sm:$0xf]
  %v513 = vld [vmem:[%s511 + $0x4] sm:$0xf]
  %v514 = vld [vmem:[%s511 + $0x8] sm:$0xf]
  %v515 = vld [vmem:[%s511 + $0xc] sm:$0xf]
  %v516 = vld [vmem:[%s511 + $0x10] sm:$0xf]
  %v517 = vld [vmem:[%s511 + $0x14] sm:$0xf]
  %v518 = vld [vmem:[%s511 + $0x18] sm:$0xf]
  %v519 = vld [vmem:[%s511 + $0x1c] sm:$0xf]
  %v520 = vld [vmem:[%s511 + $0x20] sm:$0xf]
  %v521 = vld [vmem:[%s511 + $0x24] sm:$0xf]
  %v522 = vld [vmem:[%s511 + $0x28] sm:$0xf]
  %v523 = vld [vmem:[%s511 + $0x2c] sm:$0xf]
  %v524 = vld [vmem:[%s511 + $0x30] sm:$0xf]
  %v525 = vld [vmem:[%s511 + $0x34] sm:$0xf]
  %v526 = vld [vmem:[%s511 + $0x38] sm:$0xf]
  %v527 = vld [vmem:[%s511 + $0x3c] sm:$0xf]
  %v544 = vunpack.c.l.b16 %v512
  %v545 = vunpack.c.l.b16 %v513
  %v546 = vunpack.c.l.b16 %v514
  %v547 = vunpack.c.l.b16 %v515
  %v548 = vunpack.c.l.b16 %v516
  %v549 = vunpack.c.l.b16 %v517
  %v550 = vunpack.c.l.b16 %v518
  %v551 = vunpack.c.l.b16 %v519
  %v552 = vunpack.c.l.b16 %v520
  %v553 = vunpack.c.l.b16 %v521
  %v554 = vunpack.c.l.b16 %v522
  %v555 = vunpack.c.l.b16 %v523
  %v556 = vunpack.c.l.b16 %v524
  %v557 = vunpack.c.l.b16 %v525
  %v558 = vunpack.c.l.b16 %v526
  %v559 = vunpack.c.l.b16 %v527
  %v560 = vpack.c.b16 %v545, %v544
  %v561 = vpack.c.b16 %v547, %v546
  %v562 = vpack.c.b16 %v549, %v548
  %v563 = vpack.c.b16 %v551, %v550
  %v564 = vpack.c.b16 %v553, %v552
  %v565 = vpack.c.b16 %v555, %v554
  %v566 = vpack.c.b16 %v557, %v556
  %v567 = vpack.c.b16 %v559, %v558
  %576 = vmatpush.bf16.msra.mxu0 %v567
  %577 = vmatpush.bf16.msra.mxu0 %v566
  %578 = vmatpush.bf16.msra.mxu0 %v565
  %579 = vmatpush.bf16.msra.mxu0 %v564
  %580 = vmatpush.bf16.msra.mxu0 %v563
  %581 = vmatpush.bf16.msra.mxu0 %v562
  %582 = vmatpush.bf16.msra.mxu0 %v561
  %583 = vmatpush.bf16.msra.mxu0 %v560
  %584 = vmatmul.bf16.gmra.mxu0 %v507
  %v585 = vpop.f32.mrf.mxu0
  %v586 = vadd.f32 0.0, %v585
  %v587 = vpop.f32.mrf.mxu0
  %v588 = vadd.f32 0.0, %v587
  %589 = vmatmul.bf16.gmra.mxu0 %v508
  %v590 = vpop.f32.mrf.mxu0
  %v591 = vadd.f32 0.0, %v590
  %v592 = vpop.f32.mrf.mxu0
  %v593 = vadd.f32 0.0, %v592
  %594 = vmatmul.bf16.gmra.mxu0 %v509
  %v595 = vpop.f32.mrf.mxu0
  %v596 = vadd.f32 0.0, %v595
  %v597 = vpop.f32.mrf.mxu0
  %v598 = vadd.f32 0.0, %v597
  %599 = vmatmul.bf16.gmra.mxu0 %v510
  %v600 = vpop.f32.mrf.mxu0
  %v601 = vadd.f32 0.0, %v600
  %v602 = vpop.f32.mrf.mxu0
  %603 = vdwg.mxu0
  %v604 = vadd.f32 %v482, %v586
  %v605 = vadd.f32 %v484, %v588
  %v606 = vadd.f32 %v487, %v591
  %v607 = vadd.f32 %v489, %v593
  %v608 = vadd.f32 %v492, %v596
  %v609 = vadd.f32 %v494, %v598
  %v610 = vadd.f32 %v497, %v601
  %v611 = vld [vmem:[#allocation2 + $0x10] sm:$0xff]
  %v612 = vld [vmem:[#allocation2 + $0x18] sm:$0xff]
  %v613 = vld [vmem:[#allocation2 + $0x20] sm:$0xff]
  %v614 = vld [vmem:[#allocation2 + $0x28] sm:$0xff]
  %v615 = vld [vmem:[#allocation2 + $0x30] sm:$0xff]
  %v616 = vld [vmem:[#allocation2 + $0x38] sm:$0xff]
  %v617 = vld [vmem:[#allocation2 + $0x40] sm:$0xff]
  %v618 = vpack.c.bf16 %v612, %v611
  %v619 = vpack.c.bf16 %v614, %v613
  %v620 = vpack.c.bf16 %v616, %v615
  %v621 = vpack.c.bf16 %v617, %v617
  %s622 = scalar_lea.vmem %s1, 320
  %v623 = vld [vmem:[%s622] sm:$0xf]
  %v624 = vld [vmem:[%s622 + $0x4] sm:$0xf]
  %v625 = vld [vmem:[%s622 + $0x8] sm:$0xf]
  %v626 = vld [vmem:[%s622 + $0xc] sm:$0xf]
  %v627 = vld [vmem:[%s622 + $0x10] sm:$0xf]
  %v628 = vld [vmem:[%s622 + $0x14] sm:$0xf]
  %v629 = vld [vmem:[%s622 + $0x18] sm:$0xf]
  %v630 = vld [vmem:[%s622 + $0x1c] sm:$0xf]
  %v631 = vld [vmem:[%s622 + $0x20] sm:$0xf]
  %v632 = vld [vmem:[%s622 + $0x24] sm:$0xf]
  %v633 = vld [vmem:[%s622 + $0x28] sm:$0xf]
  %v634 = vld [vmem:[%s622 + $0x2c] sm:$0xf]
  %v635 = vld [vmem:[%s622 + $0x30] sm:$0xf]
  %v636 = vld [vmem:[%s622 + $0x34] sm:$0xf]
  %v637 = vld [vmem:[%s622 + $0x38] sm:$0xf]
  %v638 = vld [vmem:[%s622 + $0x3c] sm:$0xf]
  %v655 = vunpack.c.l.b16 %v623
  %v656 = vunpack.c.l.b16 %v624
  %v657 = vunpack.c.l.b16 %v625
  %v658 = vunpack.c.l.b16 %v626
  %v659 = vunpack.c.l.b16 %v627
  %v660 = vunpack.c.l.b16 %v628
  %v661 = vunpack.c.l.b16 %v629
  %v662 = vunpack.c.l.b16 %v630
  %v663 = vunpack.c.l.b16 %v631
  %v664 = vunpack.c.l.b16 %v632
  %v665 = vunpack.c.l.b16 %v633
  %v666 = vunpack.c.l.b16 %v634
  %v667 = vunpack.c.l.b16 %v635
  %v668 = vunpack.c.l.b16 %v636
  %v669 = vunpack.c.l.b16 %v637
  %v670 = vunpack.c.l.b16 %v638
  %v671 = vpack.c.b16 %v656, %v655
  %v672 = vpack.c.b16 %v658, %v657
  %v673 = vpack.c.b16 %v660, %v659
  %v674 = vpack.c.b16 %v662, %v661
  %v675 = vpack.c.b16 %v664, %v663
  %v676 = vpack.c.b16 %v666, %v665
  %v677 = vpack.c.b16 %v668, %v667
  %v678 = vpack.c.b16 %v670, %v669
  %687 = vmatpush.bf16.msra.mxu0 %v678
  %688 = vmatpush.bf16.msra.mxu0 %v677
  %689 = vmatpush.bf16.msra.mxu0 %v676
  %690 = vmatpush.bf16.msra.mxu0 %v675
  %691 = vmatpush.bf16.msra.mxu0 %v674
  %692 = vmatpush.bf16.msra.mxu0 %v673
  %693 = vmatpush.bf16.msra.mxu0 %v672
  %694 = vmatpush.bf16.msra.mxu0 %v671
  %695 = vmatmul.bf16.gmra.mxu0 %v618
  %v696 = vpop.f32.mrf.mxu0
  %v697 = vadd.f32 0.0, %v696
  %v698 = vpop.f32.mrf.mxu0
  %v699 = vadd.f32 0.0, %v698
  %700 = vmatmul.bf16.gmra.mxu0 %v619
  %v701 = vpop.f32.mrf.mxu0
  %v702 = vadd.f32 0.0, %v701
  %v703 = vpop.f32.mrf.mxu0
  %v704 = vadd.f32 0.0, %v703
  %705 = vmatmul.bf16.gmra.mxu0 %v620
  %v706 = vpop.f32.mrf.mxu0
  %v707 = vadd.f32 0.0, %v706
  %v708 = vpop.f32.mrf.mxu0
  %v709 = vadd.f32 0.0, %v708
  %710 = vmatmul.bf16.gmra.mxu0 %v621
  %v711 = vpop.f32.mrf.mxu0
  %v712 = vadd.f32 0.0, %v711
  %v713 = vpop.f32.mrf.mxu0
  %714 = vdwg.mxu0
  %v715 = vadd.f32 %v604, %v697
  %v716 = vadd.f32 %v605, %v699
  %v717 = vadd.f32 %v606, %v702
  %v718 = vadd.f32 %v607, %v704
  %v719 = vadd.f32 %v608, %v707
  %v720 = vadd.f32 %v609, %v709
  %v721 = vadd.f32 %v610, %v712
  %v722 = vmax.f32 %v715, 0.0
  %v723 = vmax.f32 %v716, 0.0
  %v724 = vmax.f32 %v717, 0.0
  %v725 = vmax.f32 %v718, 0.0
  %v726 = vmax.f32 %v719, 0.0
  %v727 = vmax.f32 %v720, 0.0
  %v728 = vmax.f32 %v721, 0.0
  %729 = vst [vmem:[#allocation3] sm:$0xff] %v722
  %730 = vst [vmem:[#allocation3 + $0x8] sm:$0xff] %v723
  %731 = vst [vmem:[#allocation3 + $0x10] sm:$0xff] %v724
  %732 = vst [vmem:[#allocation3 + $0x18] sm:$0xff] %v725
  %733 = vst [vmem:[#allocation3 + $0x20] sm:$0xff] %v726
  %734 = vst [vmem:[#allocation3 + $0x28] sm:$0xff] %v727
  %735 = vst [vmem:[#allocation3 + $0x30] sm:$0xff] %v728
  %v736 = vld [vmem:[#allocation3] sm:$0xff]
  %v737 = vld [vmem:[#allocation3 + $0x8] sm:$0xff]
  %v738 = vld [vmem:[#allocation3 + $0x10] sm:$0xff]
  %v739 = vld [vmem:[#allocation3 + $0x18] sm:$0xff]
  %v740 = vld [vmem:[#allocation3 + $0x20] sm:$0xff]
  %v741 = vpack.c.bf16 %v737, %v736
  %v742 = vpack.c.bf16 %v739, %v738
  %v743 = vpack.c.bf16 %v740, %v740
  %s744 = scalar_lea.vmem %s1, 384
  %v745 = vld [vmem:[%s744] sm:$0xf]
  %v746 = vld [vmem:[%s744 + $0x4] sm:$0xf]
  %v747 = vld [vmem:[%s744 + $0x8] sm:$0xf]
  %v748 = vld [vmem:[%s744 + $0xc] sm:$0xf]
  %v749 = vld [vmem:[%s744 + $0x10] sm:$0xf]
  %v750 = vld [vmem:[%s744 + $0x14] sm:$0xf]
  %v751 = vld [vmem:[%s744 + $0x18] sm:$0xf]
  %v752 = vld [vmem:[%s744 + $0x1c] sm:$0xf]
  %v753 = vld [vmem:[%s744 + $0x20] sm:$0xf]
  %v754 = vld [vmem:[%s744 + $0x24] sm:$0xf]
  %v755 = vld [vmem:[%s744 + $0x28] sm:$0xf]
  %v756 = vld [vmem:[%s744 + $0x2c] sm:$0xf]
  %v757 = vld [vmem:[%s744 + $0x30] sm:$0xf]
  %v758 = vld [vmem:[%s744 + $0x34] sm:$0xf]
  %v759 = vld [vmem:[%s744 + $0x38] sm:$0xf]
  %v760 = vld [vmem:[%s744 + $0x3c] sm:$0xf]
  %v761 = vld [vmem:[%s3 + $0x2] sm:$0x1]
  %v763 = vperm.slane %v761, 0
  %v781 = vunpack.c.l.b16 %v745
  %v782 = vunpack.c.l.b16 %v746
  %v783 = vunpack.c.l.b16 %v747
  %v784 = vunpack.c.l.b16 %v748
  %v785 = vunpack.c.l.b16 %v749
  %v786 = vunpack.c.l.b16 %v750
  %v787 = vunpack.c.l.b16 %v751
  %v788 = vunpack.c.l.b16 %v752
  %v789 = vunpack.c.l.b16 %v753
  %v790 = vunpack.c.l.b16 %v754
  %v791 = vunpack.c.l.b16 %v755
  %v792 = vunpack.c.l.b16 %v756
  %v793 = vunpack.c.l.b16 %v757
  %v794 = vunpack.c.l.b16 %v758
  %v795 = vunpack.c.l.b16 %v759
  %v796 = vunpack.c.l.b16 %v760
  %v797 = vpack.c.b16 %v782, %v781
  %v798 = vpack.c.b16 %v784, %v783
  %v799 = vpack.c.b16 %v786, %v785
  %v800 = vpack.c.b16 %v788, %v787
  %v801 = vpack.c.b16 %v790, %v789
  %v802 = vpack.c.b16 %v792, %v791
  %v803 = vpack.c.b16 %v794, %v793
  %v804 = vpack.c.b16 %v796, %v795
  %813 = vmatpush.bf16.msra.mxu0 %v804
  %814 = vmatpush.bf16.msra.mxu0 %v803
  %815 = vmatpush.bf16.msra.mxu0 %v802
  %816 = vmatpush.bf16.msra.mxu0 %v801
  %817 = vmatpush.bf16.msra.mxu0 %v800
  %818 = vmatpush.bf16.msra.mxu0 %v799
  %819 = vmatpush.bf16.msra.mxu0 %v798
  %820 = vmatpush.bf16.msra.mxu0 %v797
  %821 = vmatmul.bf16.gmra.mxu0 %v741
  %v822 = vpop.f32.mrf.mxu0
  %v823 = vadd.f32 %v763, %v822
  %v824 = vpop.f32.mrf.mxu0
  %v825 = vadd.f32 %v763, %v824
  %826 = vmatmul.bf16.gmra.mxu0 %v742
  %v827 = vpop.f32.mrf.mxu0
  %v828 = vadd.f32 %v763, %v827
  %v829 = vpop.f32.mrf.mxu0
  %v830 = vadd.f32 %v763, %v829
  %831 = vmatmul.bf16.gmra.mxu0 %v743
  %v832 = vpop.f32.mrf.mxu0
  %v833 = vadd.f32 %v763, %v832
  %v834 = vpop.f32.mrf.mxu0
  %835 = vdwg.mxu0
  %v836 = vld [vmem:[#allocation3 + $0x8] sm:$0xff]
  %v837 = vld [vmem:[#allocation3 + $0x10] sm:$0xff]
  %v838 = vld [vmem:[#allocation3 + $0x18] sm:$0xff]
  %v839 = vld [vmem:[#allocation3 + $0x20] sm:$0xff]
  %v840 = vld [vmem:[#allocation3 + $0x28] sm:$0xff]
  %v841 = vpack.c.bf16 %v837, %v836
  %v842 = vpack.c.bf16 %v839, %v838
  %v843 = vpack.c.bf16 %v840, %v840
  %s844 = scalar_lea.vmem %s1, 448
  %v845 = vld [vmem:[%s844] sm:$0xf]
  %v846 = vld [vmem:[%s844 + $0x4] sm:$0xf]
  %v847 = vld [vmem:[%s844 + $0x8] sm:$0xf]
  %v848 = vld [vmem:[%s844 + $0xc] sm:$0xf]
  %v849 = vld [vmem:[%s844 + $0x10] sm:$0xf]
  %v850 = vld [vmem:[%s844 + $0x14] sm:$0xf]
  %v851 = vld [vmem:[%s844 + $0x18] sm:$0xf]
  %v852 = vld [vmem:[%s844 + $0x1c] sm:$0xf]
  %v853 = vld [vmem:[%s844 + $0x20] sm:$0xf]
  %v854 = vld [vmem:[%s844 + $0x24] sm:$0xf]
  %v855 = vld [vmem:[%s844 + $0x28] sm:$0xf]
  %v856 = vld [vmem:[%s844 + $0x2c] sm:$0xf]
  %v857 = vld [vmem:[%s844 + $0x30] sm:$0xf]
  %v858 = vld [vmem:[%s844 + $0x34] sm:$0xf]
  %v859 = vld [vmem:[%s844 + $0x38] sm:$0xf]
  %v860 = vld [vmem:[%s844 + $0x3c] sm:$0xf]
  %v877 = vunpack.c.l.b16 %v845
  %v878 = vunpack.c.l.b16 %v846
  %v879 = vunpack.c.l.b16 %v847
  %v880 = vunpack.c.l.b16 %v848
  %v881 = vunpack.c.l.b16 %v849
  %v882 = vunpack.c.l.b16 %v850
  %v883 = vunpack.c.l.b16 %v851
  %v884 = vunpack.c.l.b16 %v852
  %v885 = vunpack.c.l.b16 %v853
  %v886 = vunpack.c.l.b16 %v854
  %v887 = vunpack.c.l.b16 %v855
  %v888 = vunpack.c.l.b16 %v856
  %v889 = vunpack.c.l.b16 %v857
  %v890 = vunpack.c.l.b16 %v858
  %v891 = vunpack.c.l.b16 %v859
  %v892 = vunpack.c.l.b16 %v860
  %v893 = vpack.c.b16 %v878, %v877
  %v894 = vpack.c.b16 %v880, %v879
  %v895 = vpack.c.b16 %v882, %v881
  %v896 = vpack.c.b16 %v884, %v883
  %v897 = vpack.c.b16 %v886, %v885
  %v898 = vpack.c.b16 %v888, %v887
  %v899 = vpack.c.b16 %v890, %v889
  %v900 = vpack.c.b16 %v892, %v891
  %909 = vmatpush.bf16.msra.mxu0 %v900
  %910 = vmatpush.bf16.msra.mxu0 %v899
  %911 = vmatpush.bf16.msra.mxu0 %v898
  %912 = vmatpush.bf16.msra.mxu0 %v897
  %913 = vmatpush.bf16.msra.mxu0 %v896
  %914 = vmatpush.bf16.msra.mxu0 %v895
  %915 = vmatpush.bf16.msra.mxu0 %v894
  %916 = vmatpush.bf16.msra.mxu0 %v893
  %917 = vmatmul.bf16.gmra.mxu0 %v841
  %v918 = vpop.f32.mrf.mxu0
  %v919 = vadd.f32 0.0, %v918
  %v920 = vpop.f32.mrf.mxu0
  %v921 = vadd.f32 0.0, %v920
  %922 = vmatmul.bf16.gmra.mxu0 %v842
  %v923 = vpop.f32.mrf.mxu0
  %v924 = vadd.f32 0.0, %v923
  %v925 = vpop.f32.mrf.mxu0
  %v926 = vadd.f32 0.0, %v925
  %927 = vmatmul.bf16.gmra.mxu0 %v843
  %v928 = vpop.f32.mrf.mxu0
  %v929 = vadd.f32 0.0, %v928
  %v930 = vpop.f32.mrf.mxu0
  %931 = vdwg.mxu0
  %v932 = vadd.f32 %v823, %v919
  %v933 = vadd.f32 %v825, %v921
  %v934 = vadd.f32 %v828, %v924
  %v935 = vadd.f32 %v830, %v926
  %v936 = vadd.f32 %v833, %v929
  %v937 = vld [vmem:[#allocation3 + $0x10] sm:$0xff]
  %v938 = vld [vmem:[#allocation3 + $0x18] sm:$0xff]
  %v939 = vld [vmem:[#allocation3 + $0x20] sm:$0xff]
  %v940 = vld [vmem:[#allocation3 + $0x28] sm:$0xff]
  %v941 = vld [vmem:[#allocation3 + $0x30] sm:$0xff]
  %v942 = vpack.c.bf16 %v938, %v937
  %v943 = vpack.c.bf16 %v940, %v939
  %v944 = vpack.c.bf16 %v941, %v941
  %s945 = scalar_lea.vmem %s1, 512
  %v946 = vld [vmem:[%s945] sm:$0xf]
  %v947 = vld [vmem:[%s945 + $0x4] sm:$0xf]
  %v948 = vld [vmem:[%s945 + $0x8] sm:$0xf]
  %v949 = vld [vmem:[%s945 + $0xc] sm:$0xf]
  %v950 = vld [vmem:[%s945 + $0x10] sm:$0xf]
  %v951 = vld [vmem:[%s945 + $0x14] sm:$0xf]
  %v952 = vld [vmem:[%s945 + $0x18] sm:$0xf]
  %v953 = vld [vmem:[%s945 + $0x1c] sm:$0xf]
  %v954 = vld [vmem:[%s945 + $0x20] sm:$0xf]
  %v955 = vld [vmem:[%s945 + $0x24] sm:$0xf]
  %v956 = vld [vmem:[%s945 + $0x28] sm:$0xf]
  %v957 = vld [vmem:[%s945 + $0x2c] sm:$0xf]
  %v958 = vld [vmem:[%s945 + $0x30] sm:$0xf]
  %v959 = vld [vmem:[%s945 + $0x34] sm:$0xf]
  %v960 = vld [vmem:[%s945 + $0x38] sm:$0xf]
  %v961 = vld [vmem:[%s945 + $0x3c] sm:$0xf]
  %v978 = vunpack.c.l.b16 %v946
  %v979 = vunpack.c.l.b16 %v947
  %v980 = vunpack.c.l.b16 %v948
  %v981 = vunpack.c.l.b16 %v949
  %v982 = vunpack.c.l.b16 %v950
  %v983 = vunpack.c.l.b16 %v951
  %v984 = vunpack.c.l.b16 %v952
  %v985 = vunpack.c.l.b16 %v953
  %v986 = vunpack.c.l.b16 %v954
  %v987 = vunpack.c.l.b16 %v955
  %v988 = vunpack.c.l.b16 %v956
  %v989 = vunpack.c.l.b16 %v957
  %v990 = vunpack.c.l.b16 %v958
  %v991 = vunpack.c.l.b16 %v959
  %v992 = vunpack.c.l.b16 %v960
  %v993 = vunpack.c.l.b16 %v961
  %v994 = vpack.c.b16 %v979, %v978
  %v995 = vpack.c.b16 %v981, %v980
  %v996 = vpack.c.b16 %v983, %v982
  %v997 = vpack.c.b16 %v985, %v984
  %v998 = vpack.c.b16 %v987, %v986
  %v999 = vpack.c.b16 %v989, %v988
  %v1000 = vpack.c.b16 %v991, %v990
  %v1001 = vpack.c.b16 %v993, %v992
  %1010 = vmatpush.bf16.msra.mxu0 %v1001
  %1011 = vmatpush.bf16.msra.mxu0 %v1000
  %1012 = vmatpush.bf16.msra.mxu0 %v999
  %1013 = vmatpush.bf16.msra.mxu0 %v998
  %1014 = vmatpush.bf16.msra.mxu0 %v997
  %1015 = vmatpush.bf16.msra.mxu0 %v996
  %1016 = vmatpush.bf16.msra.mxu0 %v995
  %1017 = vmatpush.bf16.msra.mxu0 %v994
  %1018 = vmatmul.bf16.gmra.mxu0 %v942
  %v1019 = vpop.f32.mrf.mxu0
  %v1020 = vadd.f32 0.0, %v1019
  %v1021 = vpop.f32.mrf.mxu0
  %v1022 = vadd.f32 0.0, %v1021
  %1023 = vmatmul.bf16.gmra.mxu0 %v943
  %v1024 = vpop.f32.mrf.mxu0
  %v1025 = vadd.f32 0.0, %v1024
  %v1026 = vpop.f32.mrf.mxu0
  %v1027 = vadd.f32 0.0, %v1026
  %1028 = vmatmul.bf16.gmra.mxu0 %v944
  %v1029 = vpop.f32.mrf.mxu0
  %v1030 = vadd.f32 0.0, %v1029
  %v1031 = vpop.f32.mrf.mxu0
  %1032 = vdwg.mxu0
  %v1033 = vadd.f32 %v932, %v1020
  %v1034 = vadd.f32 %v933, %v1022
  %v1035 = vadd.f32 %v934, %v1025
  %v1036 = vadd.f32 %v935, %v1027
  %v1037 = vadd.f32 %v936, %v1030
  %v1038 = vmax.f32 %v1033, 0.0
  %v1039 = vmax.f32 %v1034, 0.0
  %v1040 = vmax.f32 %v1035, 0.0
  %v1041 = vmax.f32 %v1036, 0.0
  %v1042 = vmax.f32 %v1037, 0.0
  %1043 = vst [vmem:[#allocation4] sm:$0xff] %v1038
  %1044 = vst [vmem:[#allocation4 + $0x8] sm:$0xff] %v1039
  %1045 = vst [vmem:[#allocation4 + $0x10] sm:$0xff] %v1040
  %1046 = vst [vmem:[#allocation4 + $0x18] sm:$0xff] %v1041
  %1047 = vst [vmem:[#allocation4 + $0x20] sm:$0xff] %v1042
  %v1048 = vld [vmem:[#allocation4] sm:$0xff]
  %v1049 = vpack.c.bf16 %v1048, %v1048
  %v1050 = vld [vmem:[%s2] sm:$0xf]
  %v1051 = vld [vmem:[%s2 + $0x4] sm:$0xf]
  %v1052 = vld [vmem:[%s2 + $0x8] sm:$0xf]
  %v1053 = vld [vmem:[%s2 + $0xc] sm:$0xf]
  %v1054 = vld [vmem:[%s2 + $0x10] sm:$0xf]
  %v1055 = vld [vmem:[%s2 + $0x14] sm:$0xf]
  %v1056 = vld [vmem:[%s2 + $0x18] sm:$0xf]
  %v1057 = vld [vmem:[%s2 + $0x1c] sm:$0xf]
  %v1058 = vld [vmem:[%s2 + $0x20] sm:$0xf]
  %v1059 = vld [vmem:[%s2 + $0x24] sm:$0xf]
  %v1060 = vld [vmem:[%s2 + $0x28] sm:$0xf]
  %v1061 = vld [vmem:[%s2 + $0x2c] sm:$0xf]
  %v1062 = vld [vmem:[%s2 + $0x30] sm:$0xf]
  %v1063 = vld [vmem:[%s2 + $0x34] sm:$0xf]
  %v1064 = vld [vmem:[%s2 + $0x38] sm:$0xf]
  %v1065 = vld [vmem:[%s2 + $0x3c] sm:$0xf]
  %v1066 = vld [vmem:[%s3 + $0x3] sm:$0x1]
  %v1068 = vperm.slane %v1066, 0
  %v1086 = vunpack.c.l.b16 %v1050
  %v1087 = vunpack.c.l.b16 %v1051
  %v1088 = vunpack.c.l.b16 %v1052
  %v1089 = vunpack.c.l.b16 %v1053
  %v1090 = vunpack.c.l.b16 %v1054
  %v1091 = vunpack.c.l.b16 %v1055
  %v1092 = vunpack.c.l.b16 %v1056
  %v1093 = vunpack.c.l.b16 %v1057
  %v1094 = vunpack.c.l.b16 %v1058
  %v1095 = vunpack.c.l.b16 %v1059
  %v1096 = vunpack.c.l.b16 %v1060
  %v1097 = vunpack.c.l.b16 %v1061
  %v1098 = vunpack.c.l.b16 %v1062
  %v1099 = vunpack.c.l.b16 %v1063
  %v1100 = vunpack.c.l.b16 %v1064
  %v1101 = vunpack.c.l.b16 %v1065
  %v1102 = vpack.c.b16 %v1087, %v1086
  %v1103 = vpack.c.b16 %v1089, %v1088
  %v1104 = vpack.c.b16 %v1091, %v1090
  %v1105 = vpack.c.b16 %v1093, %v1092
  %v1106 = vpack.c.b16 %v1095, %v1094
  %v1107 = vpack.c.b16 %v1097, %v1096
  %v1108 = vpack.c.b16 %v1099, %v1098
  %v1109 = vpack.c.b16 %v1101, %v1100
  %1118 = vmatpush.bf16.msra.mxu0 %v1109
  %1119 = vmatpush.bf16.msra.mxu0 %v1108
  %1120 = vmatpush.bf16.msra.mxu0 %v1107
  %1121 = vmatpush.bf16.msra.mxu0 %v1106
  %1122 = vmatpush.bf16.msra.mxu0 %v1105
  %1123 = vmatpush.bf16.msra.mxu0 %v1104
  %1124 = vmatpush.bf16.msra.mxu0 %v1103
  %1125 = vmatpush.bf16.msra.mxu0 %v1102
  %1126 = vmatmul.bf16.gmra.mxu0 %v1049
  %v1127 = vpop.f32.mrf.mxu0
  %v1128 = vadd.f32 %v1068, %v1127
  %v1129 = vpop.f32.mrf.mxu0
  %1130 = vdwg.mxu0
  %v1131 = vld [vmem:[#allocation4 + $0x8] sm:$0xff]
  %v1132 = vpack.c.bf16 %v1131, %v1131
  %v1133 = vld [vmem:[%s2 + $0x40] sm:$0xf]
  %v1134 = vld [vmem:[%s2 + $0x44] sm:$0xf]
  %v1135 = vld [vmem:[%s2 + $0x48] sm:$0xf]
  %v1136 = vld [vmem:[%s2 + $0x4c] sm:$0xf]
  %v1137 = vld [vmem:[%s2 + $0x50] sm:$0xf]
  %v1138 = vld [vmem:[%s2 + $0x54] sm:$0xf]
  %v1139 = vld [vmem:[%s2 + $0x58] sm:$0xf]
  %v1140 = vld [vmem:[%s2 + $0x5c] sm:$0xf]
  %v1141 = vld [vmem:[%s2 + $0x60] sm:$0xf]
  %v1142 = vld [vmem:[%s2 + $0x64] sm:$0xf]
  %v1143 = vld [vmem:[%s2 + $0x68] sm:$0xf]
  %v1144 = vld [vmem:[%s2 + $0x6c] sm:$0xf]
  %v1145 = vld [vmem:[%s2 + $0x70] sm:$0xf]
  %v1146 = vld [vmem:[%s2 + $0x74] sm:$0xf]
  %v1147 = vld [vmem:[%s2 + $0x78] sm:$0xf]
  %v1148 = vld [vmem:[%s2 + $0x7c] sm:$0xf]
  %v1165 = vunpack.c.l.b16 %v1133
  %v1166 = vunpack.c.l.b16 %v1134
  %v1167 = vunpack.c.l.b16 %v1135
  %v1168 = vunpack.c.l.b16 %v1136
  %v1169 = vunpack.c.l.b16 %v1137
  %v1170 = vunpack.c.l.b16 %v1138
  %v1171 = vunpack.c.l.b16 %v1139
  %v1172 = vunpack.c.l.b16 %v1140
  %v1173 = vunpack.c.l.b16 %v1141
  %v1174 = vunpack.c.l.b16 %v1142
  %v1175 = vunpack.c.l.b16 %v1143
  %v1176 = vunpack.c.l.b16 %v1144
  %v1177 = vunpack.c.l.b16 %v1145
  %v1178 = vunpack.c.l.b16 %v1146
  %v1179 = vunpack.c.l.b16 %v1147
  %v1180 = vunpack.c.l.b16 %v1148
  %v1181 = vpack.c.b16 %v1166, %v1165
  %v1182 = vpack.c.b16 %v1168, %v1167
  %v1183 = vpack.c.b16 %v1170, %v1169
  %v1184 = vpack.c.b16 %v1172, %v1171
  %v1185 = vpack.c.b16 %v1174, %v1173
  %v1186 = vpack.c.b16 %v1176, %v1175
  %v1187 = vpack.c.b16 %v1178, %v1177
  %v1188 = vpack.c.b16 %v1180, %v1179
  %1197 = vmatpush.bf16.msra.mxu0 %v1188
  %1198 = vmatpush.bf16.msra.mxu0 %v1187
  %1199 = vmatpush.bf16.msra.mxu0 %v1186
  %1200 = vmatpush.bf16.msra.mxu0 %v1185
  %1201 = vmatpush.bf16.msra.mxu0 %v1184
  %1202 = vmatpush.bf16.msra.mxu0 %v1183
  %1203 = vmatpush.bf16.msra.mxu0 %v1182
  %1204 = vmatpush.bf16.msra.mxu0 %v1181
  %1205 = vmatmul.bf16.gmra.mxu0 %v1132
  %v1206 = vpop.f32.mrf.mxu0
  %v1207 = vadd.f32 0.0, %v1206
  %v1208 = vpop.f32.mrf.mxu0
  %1209 = vdwg.mxu0
  %v1210 = vadd.f32 %v1128, %v1207
  %v1211 = vld [vmem:[#allocation4 + $0x10] sm:$0xff]
  %v1212 = vpack.c.bf16 %v1211, %v1211
  %v1213 = vld [vmem:[%s2 + $0x80] sm:$0xf]
  %v1214 = vld [vmem:[%s2 + $0x84] sm:$0xf]
  %v1215 = vld [vmem:[%s2 + $0x88] sm:$0xf]
  %v1216 = vld [vmem:[%s2 + $0x8c] sm:$0xf]
  %v1217 = vld [vmem:[%s2 + $0x90] sm:$0xf]
  %v1218 = vld [vmem:[%s2 + $0x94] sm:$0xf]
  %v1219 = vld [vmem:[%s2 + $0x98] sm:$0xf]
  %v1220 = vld [vmem:[%s2 + $0x9c] sm:$0xf]
  %v1221 = vld [vmem:[%s2 + $0xa0] sm:$0xf]
  %v1222 = vld [vmem:[%s2 + $0xa4] sm:$0xf]
  %v1223 = vld [vmem:[%s2 + $0xa8] sm:$0xf]
  %v1224 = vld [vmem:[%s2 + $0xac] sm:$0xf]
  %v1225 = vld [vmem:[%s2 + $0xb0] sm:$0xf]
  %v1226 = vld [vmem:[%s2 + $0xb4] sm:$0xf]
  %v1227 = vld [vmem:[%s2 + $0xb8] sm:$0xf]
  %v1228 = vld [vmem:[%s2 + $0xbc] sm:$0xf]
  %v1245 = vunpack.c.l.b16 %v1213
  %v1246 = vunpack.c.l.b16 %v1214
  %v1247 = vunpack.c.l.b16 %v1215
  %v1248 = vunpack.c.l.b16 %v1216
  %v1249 = vunpack.c.l.b16 %v1217
  %v1250 = vunpack.c.l.b16 %v1218
  %v1251 = vunpack.c.l.b16 %v1219
  %v1252 = vunpack.c.l.b16 %v1220
  %v1253 = vunpack.c.l.b16 %v1221
  %v1254 = vunpack.c.l.b16 %v1222
  %v1255 = vunpack.c.l.b16 %v1223
  %v1256 = vunpack.c.l.b16 %v1224
  %v1257 = vunpack.c.l.b16 %v1225
  %v1258 = vunpack.c.l.b16 %v1226
  %v1259 = vunpack.c.l.b16 %v1227
  %v1260 = vunpack.c.l.b16 %v1228
  %v1261 = vpack.c.b16 %v1246, %v1245
  %v1262 = vpack.c.b16 %v1248, %v1247
  %v1263 = vpack.c.b16 %v1250, %v1249
  %v1264 = vpack.c.b16 %v1252, %v1251
  %v1265 = vpack.c.b16 %v1254, %v1253
  %v1266 = vpack.c.b16 %v1256, %v1255
  %v1267 = vpack.c.b16 %v1258, %v1257
  %v1268 = vpack.c.b16 %v1260, %v1259
  %1277 = vmatpush.bf16.msra.mxu0 %v1268
  %1278 = vmatpush.bf16.msra.mxu0 %v1267
  %1279 = vmatpush.bf16.msra.mxu0 %v1266
  %1280 = vmatpush.bf16.msra.mxu0 %v1265
  %1281 = vmatpush.bf16.msra.mxu0 %v1264
  %1282 = vmatpush.bf16.msra.mxu0 %v1263
  %1283 = vmatpush.bf16.msra.mxu0 %v1262
  %1284 = vmatpush.bf16.msra.mxu0 %v1261
  %1285 = vmatmul.bf16.gmra.mxu0 %v1212
  %v1286 = vpop.f32.mrf.mxu0
  %v1287 = vadd.f32 0.0, %v1286
  %v1288 = vpop.f32.mrf.mxu0
  %1289 = vdwg.mxu0
  %v1290 = vadd.f32 %v1210, %v1287
  %v1291 = vld [vmem:[#allocation4 + $0x18] sm:$0xff]
  %v1292 = vpack.c.bf16 %v1291, %v1291
  %v1293 = vld [vmem:[%s2 + $0xc0] sm:$0xf]
  %v1294 = vld [vmem:[%s2 + $0xc4] sm:$0xf]
  %v1295 = vld [vmem:[%s2 + $0xc8] sm:$0xf]
  %v1296 = vld [vmem:[%s2 + $0xcc] sm:$0xf]
  %v1297 = vld [vmem:[%s2 + $0xd0] sm:$0xf]
  %v1298 = vld [vmem:[%s2 + $0xd4] sm:$0xf]
  %v1299 = vld [vmem:[%s2 + $0xd8] sm:$0xf]
  %v1300 = vld [vmem:[%s2 + $0xdc] sm:$0xf]
  %v1301 = vld [vmem:[%s2 + $0xe0] sm:$0xf]
  %v1302 = vld [vmem:[%s2 + $0xe4] sm:$0xf]
  %v1303 = vld [vmem:[%s2 + $0xe8] sm:$0xf]
  %v1304 = vld [vmem:[%s2 + $0xec] sm:$0xf]
  %v1305 = vld [vmem:[%s2 + $0xf0] sm:$0xf]
  %v1306 = vld [vmem:[%s2 + $0xf4] sm:$0xf]
  %v1307 = vld [vmem:[%s2 + $0xf8] sm:$0xf]
  %v1308 = vld [vmem:[%s2 + $0xfc] sm:$0xf]
  %v1325 = vunpack.c.l.b16 %v1293
  %v1326 = vunpack.c.l.b16 %v1294
  %v1327 = vunpack.c.l.b16 %v1295
  %v1328 = vunpack.c.l.b16 %v1296
  %v1329 = vunpack.c.l.b16 %v1297
  %v1330 = vunpack.c.l.b16 %v1298
  %v1331 = vunpack.c.l.b16 %v1299
  %v1332 = vunpack.c.l.b16 %v1300
  %v1333 = vunpack.c.l.b16 %v1301
  %v1334 = vunpack.c.l.b16 %v1302
  %v1335 = vunpack.c.l.b16 %v1303
  %v1336 = vunpack.c.l.b16 %v1304
  %v1337 = vunpack.c.l.b16 %v1305
  %v1338 = vunpack.c.l.b16 %v1306
  %v1339 = vunpack.c.l.b16 %v1307
  %v1340 = vunpack.c.l.b16 %v1308
  %v1341 = vpack.c.b16 %v1326, %v1325
  %v1342 = vpack.c.b16 %v1328, %v1327
  %v1343 = vpack.c.b16 %v1330, %v1329
  %v1344 = vpack.c.b16 %v1332, %v1331
  %v1345 = vpack.c.b16 %v1334, %v1333
  %v1346 = vpack.c.b16 %v1336, %v1335
  %v1347 = vpack.c.b16 %v1338, %v1337
  %v1348 = vpack.c.b16 %v1340, %v1339
  %1357 = vmatpush.bf16.msra.mxu0 %v1348
  %1358 = vmatpush.bf16.msra.mxu0 %v1347
  %1359 = vmatpush.bf16.msra.mxu0 %v1346
  %1360 = vmatpush.bf16.msra.mxu0 %v1345
  %1361 = vmatpush.bf16.msra.mxu0 %v1344
  %1362 = vmatpush.bf16.msra.mxu0 %v1343
  %1363 = vmatpush.bf16.msra.mxu0 %v1342
  %1364 = vmatpush.bf16.msra.mxu0 %v1341
  %1365 = vmatmul.bf16.gmra.mxu0 %v1292
  %v1366 = vpop.f32.mrf.mxu0
  %v1367 = vadd.f32 0.0, %v1366
  %v1368 = vpop.f32.mrf.mxu0
  %1369 = vdwg.mxu0
  %v1370 = vadd.f32 %v1290, %v1367
  %v1371 = vld [vmem:[#allocation4 + $0x20] sm:$0xff]
  %v1372 = vpack.c.bf16 %v1371, %v1371
  %v1373 = vld [vmem:[%s2 + $0x100] sm:$0xf]
  %v1374 = vld [vmem:[%s2 + $0x104] sm:$0xf]
  %v1375 = vld [vmem:[%s2 + $0x108] sm:$0xf]
  %v1376 = vld [vmem:[%s2 + $0x10c] sm:$0xf]
  %v1377 = vld [vmem:[%s2 + $0x110] sm:$0xf]
  %v1378 = vld [vmem:[%s2 + $0x114] sm:$0xf]
  %v1379 = vld [vmem:[%s2 + $0x118] sm:$0xf]
  %v1380 = vld [vmem:[%s2 + $0x11c] sm:$0xf]
  %v1381 = vld [vmem:[%s2 + $0x120] sm:$0xf]
  %v1382 = vld [vmem:[%s2 + $0x124] sm:$0xf]
  %v1383 = vld [vmem:[%s2 + $0x128] sm:$0xf]
  %v1384 = vld [vmem:[%s2 + $0x12c] sm:$0xf]
  %v1385 = vld [vmem:[%s2 + $0x130] sm:$0xf]
  %v1386 = vld [vmem:[%s2 + $0x134] sm:$0xf]
  %v1387 = vld [vmem:[%s2 + $0x138] sm:$0xf]
  %v1388 = vld [vmem:[%s2 + $0x13c] sm:$0xf]
  %v1405 = vunpack.c.l.b16 %v1373
  %v1406 = vunpack.c.l.b16 %v1374
  %v1407 = vunpack.c.l.b16 %v1375
  %v1408 = vunpack.c.l.b16 %v1376
  %v1409 = vunpack.c.l.b16 %v1377
  %v1410 = vunpack.c.l.b16 %v1378
  %v1411 = vunpack.c.l.b16 %v1379
  %v1412 = vunpack.c.l.b16 %v1380
  %v1413 = vunpack.c.l.b16 %v1381
  %v1414 = vunpack.c.l.b16 %v1382
  %v1415 = vunpack.c.l.b16 %v1383
  %v1416 = vunpack.c.l.b16 %v1384
  %v1417 = vunpack.c.l.b16 %v1385
  %v1418 = vunpack.c.l.b16 %v1386
  %v1419 = vunpack.c.l.b16 %v1387
  %v1420 = vunpack.c.l.b16 %v1388
  %v1421 = vpack.c.b16 %v1406, %v1405
  %v1422 = vpack.c.b16 %v1408, %v1407
  %v1423 = vpack.c.b16 %v1410, %v1409
  %v1424 = vpack.c.b16 %v1412, %v1411
  %v1425 = vpack.c.b16 %v1414, %v1413
  %v1426 = vpack.c.b16 %v1416, %v1415
  %v1427 = vpack.c.b16 %v1418, %v1417
  %v1428 = vpack.c.b16 %v1420, %v1419
  %1437 = vmatpush.bf16.msra.mxu0 %v1428
  %1438 = vmatpush.bf16.msra.mxu0 %v1427
  %1439 = vmatpush.bf16.msra.mxu0 %v1426
  %1440 = vmatpush.bf16.msra.mxu0 %v1425
  %1441 = vmatpush.bf16.msra.mxu0 %v1424
  %1442 = vmatpush.bf16.msra.mxu0 %v1423
  %1443 = vmatpush.bf16.msra.mxu0 %v1422
  %1444 = vmatpush.bf16.msra.mxu0 %v1421
  %1445 = vmatmul.bf16.gmra.mxu0 %v1372
  %v1446 = vpop.f32.mrf.mxu0
  %v1447 = vadd.f32 0.0, %v1446
  %v1448 = vpop.f32.mrf.mxu0
  %1449 = vdwg.mxu0
  %v1450 = vadd.f32 %v1370, %v1447
  %v1451 = vmax.f32 %v1450, 0.0
  %v1452 = vpack.c.bf16 %v1451, %v1451
  %v1453 = vld [vmem:[%s2 + $0x140] sm:$0xf]
  %v1454 = vld [vmem:[%s2 + $0x144] sm:$0xf]
  %v1455 = vld [vmem:[%s2 + $0x148] sm:$0xf]
  %v1456 = vld [vmem:[%s2 + $0x14c] sm:$0xf]
  %v1457 = vld [vmem:[%s2 + $0x150] sm:$0xf]
  %v1458 = vld [vmem:[%s2 + $0x154] sm:$0xf]
  %v1459 = vld [vmem:[%s2 + $0x158] sm:$0xf]
  %v1460 = vld [vmem:[%s2 + $0x15c] sm:$0xf]
  %v1461 = vld [vmem:[%s2 + $0x160] sm:$0xf]
  %v1462 = vld [vmem:[%s2 + $0x164] sm:$0xf]
  %v1463 = vld [vmem:[%s2 + $0x168] sm:$0xf]
  %v1464 = vld [vmem:[%s2 + $0x16c] sm:$0xf]
  %v1465 = vld [vmem:[%s2 + $0x170] sm:$0xf]
  %v1466 = vld [vmem:[%s2 + $0x174] sm:$0xf]
  %v1467 = vld [vmem:[%s2 + $0x178] sm:$0xf]
  %v1468 = vld [vmem:[%s2 + $0x17c] sm:$0xf]
  %v1469 = vld [vmem:[%s3 + $0x4] sm:$0x1]
  %v1471 = vperm.slane %v1469, 0
  %v1489 = vunpack.c.l.b16 %v1453
  %v1490 = vunpack.c.l.b16 %v1454
  %v1491 = vunpack.c.l.b16 %v1455
  %v1492 = vunpack.c.l.b16 %v1456
  %v1493 = vunpack.c.l.b16 %v1457
  %v1494 = vunpack.c.l.b16 %v1458
  %v1495 = vunpack.c.l.b16 %v1459
  %v1496 = vunpack.c.l.b16 %v1460
  %v1497 = vunpack.c.l.b16 %v1461
  %v1498 = vunpack.c.l.b16 %v1462
  %v1499 = vunpack.c.l.b16 %v1463
  %v1500 = vunpack.c.l.b16 %v1464
  %v1501 = vunpack.c.l.b16 %v1465
  %v1502 = vunpack.c.l.b16 %v1466
  %v1503 = vunpack.c.l.b16 %v1467
  %v1504 = vunpack.c.l.b16 %v1468
  %v1505 = vpack.c.b16 %v1490, %v1489
  %v1506 = vpack.c.b16 %v1492, %v1491
  %v1507 = vpack.c.b16 %v1494, %v1493
  %v1508 = vpack.c.b16 %v1496, %v1495
  %v1509 = vpack.c.b16 %v1498, %v1497
  %v1510 = vpack.c.b16 %v1500, %v1499
  %v1511 = vpack.c.b16 %v1502, %v1501
  %v1512 = vpack.c.b16 %v1504, %v1503
  %1521 = vmatpush.bf16.msra.mxu0 %v1512
  %1522 = vmatpush.bf16.msra.mxu0 %v1511
  %1523 = vmatpush.bf16.msra.mxu0 %v1510
  %1524 = vmatpush.bf16.msra.mxu0 %v1509
  %1525 = vmatpush.bf16.msra.mxu0 %v1508
  %1526 = vmatpush.bf16.msra.mxu0 %v1507
  %1527 = vmatpush.bf16.msra.mxu0 %v1506
  %1528 = vmatpush.bf16.msra.mxu0 %v1505
  %1529 = vmatmul.bf16.gmra.mxu0 %v1452
  %v1530 = vpop.f32.mrf.mxu0
  %v1531 = vadd.f32 %v1471, %v1530
  %v1532 = vpop.f32.mrf.mxu0
  %1533 = vdwg.mxu0
  %1534 = vst [vmem:[%s4] sm:$0xff] %v1531
  // Predicated region
  $region18: #{dqn_forward.1} parent=0 // pred_check
    _
  $region19: #{dqn_forward.1} parent=0 // pred_check_branch
    %1536 = sbr.rel (0) target = $region21
  $region20: #{dqn_forward.1} parent=0 // pred_region
    _
  $region21: #{dqn_forward.1} parent=0 // pred_fallthru
    _
  // Predicated region
  $region22: #{dqn_forward.1} parent=0 // pred_check
    _
  $region23: #{dqn_forward.1} parent=0 // pred_check_branch
    %1538 = sbr.rel (0) target = $region25
  $region24: #{dqn_forward.1} parent=0 // pred_region
    _
  $region25: #{dqn_forward.1} parent=0 // pred_fallthru
    _

</llo_original>
